<compile_context>
chip_gen: v7x
topology: tpu7x:2x2x1
jax: 0.10.0
libtpu: 0.0.40
codegen_flags: <defaults>
</compile_context>

<pallas_src>
import functools
import math

import jax
import jax.numpy as jnp
from jax.experimental import pallas as pl
from jax.experimental.pallas import tpu as pltpu

REVIN_EPS = 1e-5
BN_EPS = 1e-5
MH_CONST = 2.0 / (math.sqrt(3.0) * (math.pi ** 0.25))  # mexican-hat constant
LANE = 128


def _round_up(x, m):
    return ((x + m - 1) // m) * m


def _pick_vmem_limit():
    """~3/4 of physical VMEM, clamped to [32, 96] MiB (48 MiB on v7x)."""
    try:
        cap = int(pltpu.get_tpu_info().vmem_capacity_bytes)
    except Exception:
        cap = 64 * 1024 * 1024
    return max(32 * 1024 * 1024, min(96 * 1024 * 1024, (cap * 3) // 4))


# ----------------------------------------------------------------------------- kernel
def _rmok_kernel(x_ref, rev_ref, w_ref, b_ref, wp3_ref, wp4_ref, out_ref, *,
                 num_experts, gate_off):
    x = x_ref[...]                                        # (T, L) f32
    tile, L = x.shape
    ppad = out_ref.shape[-1]

    revw = rev_ref[:, 0:1]                                # RevIN affine weight
    revb = rev_ref[:, 1:2]                                # RevIN affine bias
    rinv = rev_ref[:, 2:3]                                # 1 / (w + eps^2)

    # ---- RevIN 'norm' (per-row stats over the history length) ----
    mean = jnp.mean(x, axis=-1, keepdims=True)
    d = x - mean
    var = jnp.mean(d * d, axis=-1, keepdims=True)
    rstd = jax.lax.rsqrt(var + REVIN_EPS)                 # 1/stdev (EUP, no divide)
    stdev = (var + REVIN_EPS) * rstd                      # stdev for the denorm
    xn = d * (rstd * revw) + revb                         # (T, L)
    xn2 = xn * xn
    # nn.Dropout -> identity (eval-mode semantics)

    # ---- single fused MXU dot: [xn | xn^2] @ [taylor1 | taylor2 (| gate)] ----
    xcat = jnp.concatenate([xn, xn2], axis=-1)            # (T, 2L)
    y_cat = jnp.dot(xcat, w_ref[...],
                    preferred_element_type=jnp.float32) + b_ref[...]

    # ---- gating softmax ----
    logits = y_cat[:, gate_off:gate_off + num_experts]    # (T, E)
    logits = logits - jnp.max(logits, axis=-1, keepdims=True)
    eexp = jnp.exp(logits)
    score = eexp * pl.reciprocal(jnp.sum(eexp, axis=-1, keepdims=True), approx=True)
    s0, s1 = score[:, 0:1], score[:, 1:2]
    s2, s3 = score[:, 2:3], score[:, 3:4]

    # ---- WaveKAN experts: accumulate over L into (T, ppad) f32 accumulators.
    # Wave pack row layout: [0,L)=1/s, [L,2L)=t, [2L,3L)=w*bn_scale*MH_CONST,
    # row 3L = BN shift (accumulator init).  Only VPU adds; no XLU reduce.
    acc3 = jnp.broadcast_to(wp3_ref[3 * L:3 * L + 1, :], (tile, ppad))
    acc4 = jnp.broadcast_to(wp4_ref[3 * L:3 * L + 1, :], (tile, ppad))
    for l in range(L):
        xl = jnp.broadcast_to(xn[:, l:l + 1], (tile, ppad))   # shared by both experts
        z3 = (xl - wp3_ref[L + l:L + l + 1, :]) * wp3_ref[l:l + 1, :]
        z3 = z3 * z3
        acc3 = acc3 + (z3 - 1.0) * jnp.exp(-0.5 * z3) * wp3_ref[2 * L + l:2 * L + l + 1, :]
        z4 = (xl - wp4_ref[L + l:L + l + 1, :]) * wp4_ref[l:l + 1, :]
        z4 = z4 * z4
        acc4 = acc4 + (z4 - 1.0) * jnp.exp(-0.5 * z4) * wp4_ref[2 * L + l:2 * L + l + 1, :]

    # ---- mixture + RevIN 'denorm' (affine hoisted out of the output math) ----
    dscale = rinv * stdev
    doff = mean - revb * dscale
    pred = (s0 * y_cat[:, 0:ppad] + s1 * y_cat[:, ppad:2 * ppad]
            + s2 * acc3 + s3 * acc4)
    out_ref[...] = pred * dscale + doff


# ----------------------------------------------------------------------------- param packing
def pack_params(params, num_experts=4):
    """Fold constants and pack weights into lane-dense, 128-aligned blocks."""
    assert num_experts == 4, "mixture hardcodes 4 experts (2 Taylor + 2 Wave)"
    _, L, P = params["t1c"].shape
    ppad = _round_up(P, LANE)
    E = num_experts

    # Column layout of the fused weight: [taylor1 (ppad) | taylor2 (ppad) | gate?].
    # If the taylor-1 padding has room, the gate logits live there (ccat=2*ppad).
    if ppad - P >= E:
        gate_off, ccat = P, 2 * ppad
    else:
        gate_off, ccat = 2 * ppad, 2 * ppad + LANE

    # Rows [0, L) multiply xn, rows [L, 2L) multiply xn^2.
    w12 = jnp.zeros((2 * L, ccat), jnp.float32)
    w12 = w12.at[0:L, 0:P].set(params["t1c"][1])
    w12 = w12.at[L:2 * L, 0:P].set(params["t1c"][2])
    w12 = w12.at[0:L, ppad:ppad + P].set(params["t2c"][1])
    w12 = w12.at[L:2 * L, ppad:ppad + P].set(params["t2c"][2])
    w12 = w12.at[0:L, gate_off:gate_off + E].set(params["gate_w"])

    bias = jnp.zeros((1, ccat), jnp.float32)
    bias = bias.at[:, 0:P].set(
        params["t1b"] + jnp.sum(params["t1c"][0], axis=0, keepdims=True))
    bias = bias.at[:, ppad:ppad + P].set(
        params["t2b"] + jnp.sum(params["t2c"][0], axis=0, keepdims=True))
    bias = bias.at[:, gate_off:gate_off + E].set(params["gate_b"])

    def wave_pack(s, t, w, bn):
        scale, shift = bn[0], bn[1]                       # eval-mode BN scale/shift

        def pad_cols(a, fill):                            # a: (L, P) -> (L, ppad)
            full = jnp.full((L, ppad), fill, jnp.float32)
            return full.at[:, :P].set(a)

        inv_s = pad_cols((1.0 / s).T, 1.0)
        tt = pad_cols(t.T, 0.0)
        ww = pad_cols((w * (scale * MH_CONST)[:, None]).T, 0.0)   # fold BN scale + const
        sh = jnp.zeros((1, ppad), jnp.float32).at[:, :P].set(shift[None, :])
        return jnp.concatenate([inv_s, tt, ww, sh], axis=0)       # (3L+1, ppad)

    wp3 = wave_pack(params["w3s"], params["w3t"], params["w3w"], params["w3bn"])
    wp4 = wave_pack(params["w4s"], params["w4t"], params["w4w"], params["w4bn"])

    return {"w12": w12, "bias": bias, "wp3": wp3, "wp4": wp4,
            "P": P, "ppad": ppad, "ccat": ccat, "gate_off": gate_off}


# ----------------------------------------------------------------------------- wrapper
def rmok_forward(var_x, marker_x, params, *, row_tile=512, num_experts=4):
    del marker_x  # unused by the torch forward as well
    B, L, N = var_x.shape
    packed = pack_params(params, num_experts)
    P, ppad, ccat = packed["P"], packed["ppad"], packed["ccat"]
    gate_off = packed["gate_off"]

    BN = B * N
    # >= 2 grid steps whenever possible so both v7x TensorCores get work.
    tile = min(row_tile, max(8, _round_up(pl.cdiv(BN, 2), 8)))
    bn_pad = _round_up(BN, tile)
    grid = (bn_pad // tile,)

    # (B, L, N) -> (B*N, L): row r = b*N + n holds var_x[b, :, n]
    x = jnp.transpose(var_x, (0, 2, 1)).reshape(BN, L).astype(jnp.float32)
    revw = jnp.tile(params["rev_w"].reshape(1, N), (B, 1)).reshape(BN)
    revb = jnp.tile(params["rev_b"].reshape(1, N), (B, 1)).reshape(BN)
    rev = jnp.stack([revw, revb, 1.0 / (revw + REVIN_EPS * REVIN_EPS)], axis=-1)

    if bn_pad != BN:
        x = jnp.pad(x, ((0, bn_pad - BN), (0, 0)))
        rev_pad = jnp.tile(jnp.array([[1.0, 0.0, 1.0]], jnp.float32), (bn_pad - BN, 1))
        rev = jnp.concatenate([rev, rev_pad], axis=0)

    kernel = functools.partial(_rmok_kernel, num_experts=num_experts, gate_off=gate_off)

    flops = (2 * bn_pad * (2 * L) * ccat            # fused MXU dot
             + 2 * bn_pad * L * ppad * 7            # wave elementwise path
             + 12 * bn_pad * ppad + 10 * bn_pad * L)
    transcendentals = 2 * bn_pad * L * ppad + bn_pad * (num_experts + 2)
    bytes_accessed = 4 * (bn_pad * L + bn_pad * 3 + 2 * L * ccat + ccat
                          + 2 * (3 * L + 1) * ppad + bn_pad * ppad)

    out = pl.pallas_call(
        kernel,
        out_shape=jax.ShapeDtypeStruct((bn_pad, ppad), jnp.float32),
        grid=grid,
        in_specs=[
            pl.BlockSpec((tile, L), lambda i: (i, 0)),            # x rows
            pl.BlockSpec((tile, 3), lambda i: (i, 0)),            # RevIN [w, b, inv]
            pl.BlockSpec((2 * L, ccat), lambda i: (0, 0)),        # fused weights (grid-invariant)
            pl.BlockSpec((1, ccat), lambda i: (0, 0)),            # fused bias row
            pl.BlockSpec((3 * L + 1, ppad), lambda i: (0, 0)),    # wave expert 3 pack
            pl.BlockSpec((3 * L + 1, ppad), lambda i: (0, 0)),    # wave expert 4 pack
        ],
        out_specs=pl.BlockSpec((tile, ppad), lambda i: (i, 0)),
        compiler_params=pltpu.CompilerParams(
            dimension_semantics=("parallel",),
            vmem_limit_bytes=_pick_vmem_limit(),
        ),
        cost_estimate=pl.CostEstimate(
            flops=int(flops),
            transcendentals=int(transcendentals),
            bytes_accessed=int(bytes_accessed)),
    )(x, rev, packed["w12"], packed["bias"], packed["wp3"], packed["wp4"])

    # (BN_pad, ppad) -> (B, N, P) -> (B, P, N)  (matches reshape(B,N,-1).permute(0,2,1))
    return out[:BN, :P].reshape(B, N, P).transpose(0, 2, 1)


# ----------------------------------------------------------------------------- pure-JAX reference
def rmok_reference(var_x, params):
    B, L, N = var_x.shape
    P = params["t1c"].shape[-1]
    x = jnp.transpose(var_x, (0, 2, 1)).reshape(B * N, L).astype(jnp.float32)
    revw = jnp.tile(params["rev_w"].reshape(1, N), (B, 1)).reshape(B * N, 1)
    revb = jnp.tile(params["rev_b"].reshape(1, N), (B, 1)).reshape(B * N, 1)

    mean = jnp.mean(x, axis=-1, keepdims=True)
    stdev = jnp.sqrt(jnp.mean((x - mean) ** 2, axis=-1, keepdims=True) + REVIN_EPS)
    xn = (x - mean) / stdev * revw + revb

    score = jax.nn.softmax(xn @ params["gate_w"] + params["gate_b"], axis=-1)

    def taylor(c, b):
        return jnp.sum(c[0], axis=0, keepdims=True) + xn @ c[1] + (xn * xn) @ c[2] + b

    def wave(s, t, w, bn):
        xs = (xn[:, None, :] - t[None]) / s[None]
        wav = MH_CONST * (xs * xs - 1.0) * jnp.exp(-0.5 * xs * xs)
        y = jnp.sum(wav * w[None], axis=-1)
        return y * bn[0:1, :] + bn[1:2, :]

    ys = [taylor(params["t1c"], params["t1b"]),
          taylor(params["t2c"], params["t2b"]),
          wave(params["w3s"], params["w3t"], params["w3w"], params["w3bn"]),
          wave(params["w4s"], params["w4t"], params["w4w"], params["w4bn"])]
    stacked = jnp.stack(ys, axis=-1)                      # (BN, P, E)
    pred = jnp.einsum("bpe,be->bp", stacked, score)
    pred = (pred - revb) / (revw + REVIN_EPS * REVIN_EPS) * stdev + mean
    return pred.reshape(B, N, P).transpose(0, 2, 1)


# ----------------------------------------------------------------------------- params
def init_params(key, L, P, N, E=4):
    ks = jax.random.split(key, 8)
    fan_bound = 1.0 / math.sqrt(L)

    def bn_eval(P):
        gamma = jnp.ones((P,), jnp.float32)
        beta = jnp.zeros((P,), jnp.float32)
        run_mean = jnp.zeros((P,), jnp.float32)
        run_var = jnp.ones((P,), jnp.float32)
        scale = gamma / jnp.sqrt(run_var + BN_EPS)
        shift = beta - run_mean * scale
        return jnp.stack([scale, shift], axis=0)          # (2, P)

    return {
        # RevIN affine
        "rev_w": jnp.ones((N,), jnp.float32),
        "rev_b": jnp.zeros((N,), jnp.float32),
        # gate Linear(L -> E), stored (in, out)
        "gate_w": jax.random.uniform(ks[0], (L, E), jnp.float32, -fan_bound, fan_bound),
        "gate_b": jax.random.uniform(ks[1], (1, E), jnp.float32, -fan_bound, fan_bound),
        # TaylorKAN experts: coeffs stored as (order, L, P)
        "t1c": jax.random.normal(ks[2], (3, L, P), jnp.float32) * 0.01,
        "t1b": jnp.zeros((1, P), jnp.float32),
        "t2c": jax.random.normal(ks[3], (3, L, P), jnp.float32) * 0.01,
        "t2b": jnp.zeros((1, P), jnp.float32),
        # WaveKAN experts: scale, translation, wavelet_weights (P, L); BN scale/shift (2, P)
        "w3s": jnp.ones((P, L), jnp.float32),
        "w3t": jnp.zeros((P, L), jnp.float32),
        "w3w": jax.random.uniform(ks[4], (P, L), jnp.float32, -fan_bound, fan_bound),
        "w3bn": bn_eval(P),
        "w4s": jnp.ones((P, L), jnp.float32),
        "w4t": jnp.zeros((P, L), jnp.float32),
        "w4w": jax.random.uniform(ks[5], (P, L), jnp.float32, -fan_bound, fan_bound),
        "w4bn": bn_eval(P),
    }


# ----------------------------------------------------------------------------- main
if __name__ == "__main__":
    # batch, hist_len, var_num, pred_len (small, consistent with the module)
    B, L, N, P = 3, 16, 6, 12

    key = jax.random.PRNGKey(0)
    k_x, k_m, k_p = jax.random.split(key, 3)
    var_x = jax.random.normal(k_x, (B, L, N), jnp.float32)
    marker_x = jax.random.normal(k_m, (B, L, 3), jnp.float32)   # unused, like torch forward
    params = init_params(k_p, L, P, N)

    ref = rmok_reference(var_x, params)

    # Default tile selection: BN=18 rows -> tile 16, 2-step parallel grid
    # (exercises the v7x two-TensorCore sharding path) plus row padding.
    out = jax.block_until_ready(rmok_forward(var_x, marker_x, params))
    assert out.shape == (B, P, N), out.shape
    err = float(jnp.max(jnp.abs(out - ref)))
    assert jnp.allclose(out, ref, rtol=2e-3, atol=2e-3), err

    # Small explicit row tile: 3-step grid, different padding path.
    out2 = jax.block_until_ready(rmok_forward(var_x, marker_x, params, row_tile=8))
    err2 = float(jnp.max(jnp.abs(out2 - ref)))
    assert jnp.allclose(out2, ref, rtol=2e-3, atol=2e-3), err2

    print("KERNEL_OK")
</pallas_src>

<mosaic_0001>
module attributes {stable_mosaic.version = 11 : i64} {
  func.func @_rmok_kernel(%arg0: i32, %arg1: memref<16x16xf32, #tpu.memory_space<vmem>>, %arg2: memref<16x3xf32, #tpu.memory_space<vmem>>, %arg3: memref<32x256xf32, #tpu.memory_space<vmem>>, %arg4: memref<1x256xf32, #tpu.memory_space<vmem>>, %arg5: memref<49x128xf32, #tpu.memory_space<vmem>>, %arg6: memref<49x128xf32, #tpu.memory_space<vmem>>, %arg7: memref<16x128xf32, #tpu.memory_space<vmem>>) attributes {dimension_semantics = [#tpu.dimension_semantics<parallel>], iteration_bounds = array<i64: 2>, scalar_prefetch = 0 : i64, scratch_operands = 0 : i64, tpu.core_type = #tpu.core_type<tc>, window_params = [{transform_indices = @transform_0, window_bounds = array<i64: 16, 16>}, {transform_indices = @transform_1, window_bounds = array<i64: 16, 3>}, {pipeline_mode = #tpu.pipeline_mode<synchronous>, transform_indices = @transform_2, window_bounds = array<i64: 32, 256>}, {pipeline_mode = #tpu.pipeline_mode<synchronous>, transform_indices = @transform_3, window_bounds = array<i64: 1, 256>}, {pipeline_mode = #tpu.pipeline_mode<synchronous>, transform_indices = @transform_4, window_bounds = array<i64: 49, 128>}, {pipeline_mode = #tpu.pipeline_mode<synchronous>, transform_indices = @transform_5, window_bounds = array<i64: 49, 128>}, {transform_indices = @transform_6, window_bounds = array<i64: 16, 128>}]} {
    %c0 = arith.constant 0 : index
    %c0_0 = arith.constant 0 : index
    %0 = vector.load %arg1[%c0, %c0_0] : memref<16x16xf32, #tpu.memory_space<vmem>>, vector<16x16xf32>
    %c0_1 = arith.constant 0 : index
    %c0_2 = arith.constant 0 : index
    %1 = vector.load %arg2[%c0_1, %c0_2] : memref<16x3xf32, #tpu.memory_space<vmem>>, vector<16x1xf32>
    %c0_3 = arith.constant 0 : index
    %c1 = arith.constant 1 : index
    %2 = vector.load %arg2[%c0_3, %c1] : memref<16x3xf32, #tpu.memory_space<vmem>>, vector<16x1xf32>
    %c0_4 = arith.constant 0 : index
    %c2 = arith.constant 2 : index
    %3 = vector.load %arg2[%c0_4, %c2] : memref<16x3xf32, #tpu.memory_space<vmem>>, vector<16x1xf32>
    %cst = arith.constant dense<0.000000e+00> : vector<16xf32>
    %4 = vector.multi_reduction <add>, %0, %cst [1] : vector<16x16xf32> to vector<16xf32>
    %5 = vector.shape_cast %4 : vector<16xf32> to vector<16x1xf32>
    %cst_5 = arith.constant 1.600000e+01 : f32
    %6 = vector.broadcast %cst_5 : f32 to vector<16x1xf32>
    %7 = arith.divf %5, %6 : vector<16x1xf32>
    %8 = vector.broadcast %7 : vector<16x1xf32> to vector<16x16xf32>
    %9 = arith.subf %0, %8 : vector<16x16xf32>
    %10 = arith.mulf %9, %9 : vector<16x16xf32>
    %cst_6 = arith.constant dense<0.000000e+00> : vector<16xf32>
    %11 = vector.multi_reduction <add>, %10, %cst_6 [1] : vector<16x16xf32> to vector<16xf32>
    %12 = vector.shape_cast %11 : vector<16xf32> to vector<16x1xf32>
    %cst_7 = arith.constant 1.600000e+01 : f32
    %13 = vector.broadcast %cst_7 : f32 to vector<16x1xf32>
    %14 = arith.divf %12, %13 : vector<16x1xf32>
    %cst_8 = arith.constant 9.99999974E-6 : f32
    %15 = vector.broadcast %cst_8 : f32 to vector<16x1xf32>
    %16 = arith.addf %14, %15 : vector<16x1xf32>
    %17 = math.rsqrt %16 : vector<16x1xf32>
    %cst_9 = arith.constant 9.99999974E-6 : f32
    %18 = vector.broadcast %cst_9 : f32 to vector<16x1xf32>
    %19 = arith.addf %14, %18 : vector<16x1xf32>
    %20 = arith.mulf %19, %17 : vector<16x1xf32>
    %21 = arith.mulf %17, %1 : vector<16x1xf32>
    %22 = vector.broadcast %21 : vector<16x1xf32> to vector<16x16xf32>
    %23 = arith.mulf %9, %22 : vector<16x16xf32>
    %24 = vector.broadcast %2 : vector<16x1xf32> to vector<16x16xf32>
    %25 = arith.addf %23, %24 : vector<16x16xf32>
    %26 = arith.mulf %25, %25 : vector<16x16xf32>
    %27 = tpu.concatenate %25, %26 in 1 : vector<16x16xf32>, vector<16x16xf32> -> vector<16x32xf32>
    %c0_10 = arith.constant 0 : index
    %c0_11 = arith.constant 0 : index
    %28 = vector.load %arg3[%c0_10, %c0_11] : memref<32x256xf32, #tpu.memory_space<vmem>>, vector<32x256xf32>
    %cst_12 = arith.constant dense<0.000000e+00> : vector<16x256xf32>
    %29 = tpu.matmul %27, %28, %cst_12 {dimension_numbers = #tpu.dot_dimension_numbers<[1], [0], [0], [1], [0, 0, 1, 1], [], []>} : vector<16x32xf32>, vector<32x256xf32>, vector<16x256xf32> -> vector<16x256xf32>
    %c0_13 = arith.constant 0 : index
    %c0_14 = arith.constant 0 : index
    %30 = vector.load %arg4[%c0_13, %c0_14] : memref<1x256xf32, #tpu.memory_space<vmem>>, vector<1x256xf32>
    %31 = vector.broadcast %30 : vector<1x256xf32> to vector<16x256xf32>
    %32 = arith.addf %29, %31 : vector<16x256xf32>
    %33 = vector.extract_strided_slice %32 {offsets = [0, 12], sizes = [16, 4], strides = [1, 1]} : vector<16x256xf32> to vector<16x4xf32>
    %cst_15 = arith.constant dense<0xFF800000> : vector<16xf32>
    %34 = vector.multi_reduction <maximumf>, %33, %cst_15 [1] : vector<16x4xf32> to vector<16xf32>
    %35 = vector.shape_cast %34 : vector<16xf32> to vector<16x1xf32>
    %36 = vector.broadcast %35 : vector<16x1xf32> to vector<16x4xf32>
    %37 = arith.subf %33, %36 : vector<16x4xf32>
    %38 = math.exp %37 : vector<16x4xf32>
    %cst_16 = arith.constant dense<0.000000e+00> : vector<16xf32>
    %39 = vector.multi_reduction <add>, %38, %cst_16 [1] : vector<16x4xf32> to vector<16xf32>
    %40 = vector.shape_cast %39 : vector<16xf32> to vector<16x1xf32>
    %41 = tpu.reciprocal %40 {approx = true} : vector<16x1xf32> -> vector<16x1xf32>
    %42 = vector.broadcast %41 : vector<16x1xf32> to vector<16x4xf32>
    %43 = arith.mulf %38, %42 : vector<16x4xf32>
    %44 = vector.extract_strided_slice %43 {offsets = [0, 0], sizes = [16, 1], strides = [1, 1]} : vector<16x4xf32> to vector<16x1xf32>
    %45 = vector.extract_strided_slice %43 {offsets = [0, 1], sizes = [16, 1], strides = [1, 1]} : vector<16x4xf32> to vector<16x1xf32>
    %46 = vector.extract_strided_slice %43 {offsets = [0, 2], sizes = [16, 1], strides = [1, 1]} : vector<16x4xf32> to vector<16x1xf32>
    %47 = vector.extract_strided_slice %43 {offsets = [0, 3], sizes = [16, 1], strides = [1, 1]} : vector<16x4xf32> to vector<16x1xf32>
    %c48 = arith.constant 48 : index
    %c0_17 = arith.constant 0 : index
    %48 = vector.load %arg5[%c48, %c0_17] : memref<49x128xf32, #tpu.memory_space<vmem>>, vector<1x128xf32>
    %49 = vector.shape_cast %48 : vector<1x128xf32> to vector<1x128xf32>
    %50 = vector.broadcast %49 : vector<1x128xf32> to vector<16x128xf32>
    %c48_18 = arith.constant 48 : index
    %c0_19 = arith.constant 0 : index
    %51 = vector.load %arg6[%c48_18, %c0_19] : memref<49x128xf32, #tpu.memory_space<vmem>>, vector<1x128xf32>
    %52 = vector.shape_cast %51 : vector<1x128xf32> to vector<1x128xf32>
    %53 = vector.broadcast %52 : vector<1x128xf32> to vector<16x128xf32>
    %54 = vector.extract_strided_slice %25 {offsets = [0, 0], sizes = [16, 1], strides = [1, 1]} : vector<16x16xf32> to vector<16x1xf32>
    %55 = vector.shape_cast %54 : vector<16x1xf32> to vector<16x1xf32>
    %56 = vector.broadcast %55 : vector<16x1xf32> to vector<16x128xf32>
    %c16 = arith.constant 16 : index
    %c0_20 = arith.constant 0 : index
    %57 = vector.load %arg5[%c16, %c0_20] : memref<49x128xf32, #tpu.memory_space<vmem>>, vector<1x128xf32>
    %58 = vector.broadcast %57 : vector<1x128xf32> to vector<16x128xf32>
    %59 = arith.subf %56, %58 : vector<16x128xf32>
    %c0_21 = arith.constant 0 : index
    %c0_22 = arith.constant 0 : index
    %60 = vector.load %arg5[%c0_21, %c0_22] : memref<49x128xf32, #tpu.memory_space<vmem>>, vector<1x128xf32>
    %61 = vector.broadcast %60 : vector<1x128xf32> to vector<16x128xf32>
    %62 = arith.mulf %59, %61 : vector<16x128xf32>
    %63 = arith.mulf %62, %62 : vector<16x128xf32>
    %cst_23 = arith.constant 1.000000e+00 : f32
    %64 = vector.broadcast %cst_23 : f32 to vector<16x128xf32>
    %65 = arith.subf %63, %64 : vector<16x128xf32>
    %cst_24 = arith.constant -5.000000e-01 : f32
    %66 = vector.broadcast %cst_24 : f32 to vector<16x128xf32>
    %67 = arith.mulf %66, %63 : vector<16x128xf32>
    %68 = math.exp %67 : vector<16x128xf32>
    %69 = arith.mulf %65, %68 : vector<16x128xf32>
    %c32 = arith.constant 32 : index
    %c0_25 = arith.constant 0 : index
    %70 = vector.load %arg5[%c32, %c0_25] : memref<49x128xf32, #tpu.memory_space<vmem>>, vector<1x128xf32>
    %71 = vector.broadcast %70 : vector<1x128xf32> to vector<16x128xf32>
    %72 = arith.mulf %69, %71 : vector<16x128xf32>
    %73 = arith.addf %50, %72 : vector<16x128xf32>
    %c16_26 = arith.constant 16 : index
    %c0_27 = arith.constant 0 : index
    %74 = vector.load %arg6[%c16_26, %c0_27] : memref<49x128xf32, #tpu.memory_space<vmem>>, vector<1x128xf32>
    %75 = vector.broadcast %74 : vector<1x128xf32> to vector<16x128xf32>
    %76 = arith.subf %56, %75 : vector<16x128xf32>
    %c0_28 = arith.constant 0 : index
    %c0_29 = arith.constant 0 : index
    %77 = vector.load %arg6[%c0_28, %c0_29] : memref<49x128xf32, #tpu.memory_space<vmem>>, vector<1x128xf32>
    %78 = vector.broadcast %77 : vector<1x128xf32> to vector<16x128xf32>
    %79 = arith.mulf %76, %78 : vector<16x128xf32>
    %80 = arith.mulf %79, %79 : vector<16x128xf32>
    %cst_30 = arith.constant 1.000000e+00 : f32
    %81 = vector.broadcast %cst_30 : f32 to vector<16x128xf32>
    %82 = arith.subf %80, %81 : vector<16x128xf32>
    %cst_31 = arith.constant -5.000000e-01 : f32
    %83 = vector.broadcast %cst_31 : f32 to vector<16x128xf32>
    %84 = arith.mulf %83, %80 : vector<16x128xf32>
    %85 = math.exp %84 : vector<16x128xf32>
    %86 = arith.mulf %82, %85 : vector<16x128xf32>
    %c32_32 = arith.constant 32 : index
    %c0_33 = arith.constant 0 : index
    %87 = vector.load %arg6[%c32_32, %c0_33] : memref<49x128xf32, #tpu.memory_space<vmem>>, vector<1x128xf32>
    %88 = vector.broadcast %87 : vector<1x128xf32> to vector<16x128xf32>
    %89 = arith.mulf %86, %88 : vector<16x128xf32>
    %90 = arith.addf %53, %89 : vector<16x128xf32>
    %91 = vector.extract_strided_slice %25 {offsets = [0, 1], sizes = [16, 1], strides = [1, 1]} : vector<16x16xf32> to vector<16x1xf32>
    %92 = vector.shape_cast %91 : vector<16x1xf32> to vector<16x1xf32>
    %93 = vector.broadcast %92 : vector<16x1xf32> to vector<16x128xf32>
    %c17 = arith.constant 17 : index
    %c0_34 = arith.constant 0 : index
    %94 = vector.load %arg5[%c17, %c0_34] : memref<49x128xf32, #tpu.memory_space<vmem>>, vector<1x128xf32>
    %95 = vector.broadcast %94 : vector<1x128xf32> to vector<16x128xf32>
    %96 = arith.subf %93, %95 : vector<16x128xf32>
    %c1_35 = arith.constant 1 : index
    %c0_36 = arith.constant 0 : index
    %97 = vector.load %arg5[%c1_35, %c0_36] : memref<49x128xf32, #tpu.memory_space<vmem>>, vector<1x128xf32>
    %98 = vector.broadcast %97 : vector<1x128xf32> to vector<16x128xf32>
    %99 = arith.mulf %96, %98 : vector<16x128xf32>
    %100 = arith.mulf %99, %99 : vector<16x128xf32>
    %cst_37 = arith.constant 1.000000e+00 : f32
    %101 = vector.broadcast %cst_37 : f32 to vector<16x128xf32>
    %102 = arith.subf %100, %101 : vector<16x128xf32>
    %cst_38 = arith.constant -5.000000e-01 : f32
    %103 = vector.broadcast %cst_38 : f32 to vector<16x128xf32>
    %104 = arith.mulf %103, %100 : vector<16x128xf32>
    %105 = math.exp %104 : vector<16x128xf32>
    %106 = arith.mulf %102, %105 : vector<16x128xf32>
    %c33 = arith.constant 33 : index
    %c0_39 = arith.constant 0 : index
    %107 = vector.load %arg5[%c33, %c0_39] : memref<49x128xf32, #tpu.memory_space<vmem>>, vector<1x128xf32>
    %108 = vector.broadcast %107 : vector<1x128xf32> to vector<16x128xf32>
    %109 = arith.mulf %106, %108 : vector<16x128xf32>
    %110 = arith.addf %73, %109 : vector<16x128xf32>
    %c17_40 = arith.constant 17 : index
    %c0_41 = arith.constant 0 : index
    %111 = vector.load %arg6[%c17_40, %c0_41] : memref<49x128xf32, #tpu.memory_space<vmem>>, vector<1x128xf32>
    %112 = vector.broadcast %111 : vector<1x128xf32> to vector<16x128xf32>
    %113 = arith.subf %93, %112 : vector<16x128xf32>
    %c1_42 = arith.constant 1 : index
    %c0_43 = arith.constant 0 : index
    %114 = vector.load %arg6[%c1_42, %c0_43] : memref<49x128xf32, #tpu.memory_space<vmem>>, vector<1x128xf32>
    %115 = vector.broadcast %114 : vector<1x128xf32> to vector<16x128xf32>
    %116 = arith.mulf %113, %115 : vector<16x128xf32>
    %117 = arith.mulf %116, %116 : vector<16x128xf32>
    %cst_44 = arith.constant 1.000000e+00 : f32
    %118 = vector.broadcast %cst_44 : f32 to vector<16x128xf32>
    %119 = arith.subf %117, %118 : vector<16x128xf32>
    %cst_45 = arith.constant -5.000000e-01 : f32
    %120 = vector.broadcast %cst_45 : f32 to vector<16x128xf32>
    %121 = arith.mulf %120, %117 : vector<16x128xf32>
    %122 = math.exp %121 : vector<16x128xf32>
    %123 = arith.mulf %119, %122 : vector<16x128xf32>
    %c33_46 = arith.constant 33 : index
    %c0_47 = arith.constant 0 : index
    %124 = vector.load %arg6[%c33_46, %c0_47] : memref<49x128xf32, #tpu.memory_space<vmem>>, vector<1x128xf32>
    %125 = vector.broadcast %124 : vector<1x128xf32> to vector<16x128xf32>
    %126 = arith.mulf %123, %125 : vector<16x128xf32>
    %127 = arith.addf %90, %126 : vector<16x128xf32>
    %128 = vector.extract_strided_slice %25 {offsets = [0, 2], sizes = [16, 1], strides = [1, 1]} : vector<16x16xf32> to vector<16x1xf32>
    %129 = vector.shape_cast %128 : vector<16x1xf32> to vector<16x1xf32>
    %130 = vector.broadcast %129 : vector<16x1xf32> to vector<16x128xf32>
    %c18 = arith.constant 18 : index
    %c0_48 = arith.constant 0 : index
    %131 = vector.load %arg5[%c18, %c0_48] : memref<49x128xf32, #tpu.memory_space<vmem>>, vector<1x128xf32>
    %132 = vector.broadcast %131 : vector<1x128xf32> to vector<16x128xf32>
    %133 = arith.subf %130, %132 : vector<16x128xf32>
    %c2_49 = arith.constant 2 : index
    %c0_50 = arith.constant 0 : index
    %134 = vector.load %arg5[%c2_49, %c0_50] : memref<49x128xf32, #tpu.memory_space<vmem>>, vector<1x128xf32>
    %135 = vector.broadcast %134 : vector<1x128xf32> to vector<16x128xf32>
    %136 = arith.mulf %133, %135 : vector<16x128xf32>
    %137 = arith.mulf %136, %136 : vector<16x128xf32>
    %cst_51 = arith.constant 1.000000e+00 : f32
    %138 = vector.broadcast %cst_51 : f32 to vector<16x128xf32>
    %139 = arith.subf %137, %138 : vector<16x128xf32>
    %cst_52 = arith.constant -5.000000e-01 : f32
    %140 = vector.broadcast %cst_52 : f32 to vector<16x128xf32>
    %141 = arith.mulf %140, %137 : vector<16x128xf32>
    %142 = math.exp %141 : vector<16x128xf32>
    %143 = arith.mulf %139, %142 : vector<16x128xf32>
    %c34 = arith.constant 34 : index
    %c0_53 = arith.constant 0 : index
    %144 = vector.load %arg5[%c34, %c0_53] : memref<49x128xf32, #tpu.memory_space<vmem>>, vector<1x128xf32>
    %145 = vector.broadcast %144 : vector<1x128xf32> to vector<16x128xf32>
    %146 = arith.mulf %143, %145 : vector<16x128xf32>
    %147 = arith.addf %110, %146 : vector<16x128xf32>
    %c18_54 = arith.constant 18 : index
    %c0_55 = arith.constant 0 : index
    %148 = vector.load %arg6[%c18_54, %c0_55] : memref<49x128xf32, #tpu.memory_space<vmem>>, vector<1x128xf32>
    %149 = vector.broadcast %148 : vector<1x128xf32> to vector<16x128xf32>
    %150 = arith.subf %130, %149 : vector<16x128xf32>
    %c2_56 = arith.constant 2 : index
    %c0_57 = arith.constant 0 : index
    %151 = vector.load %arg6[%c2_56, %c0_57] : memref<49x128xf32, #tpu.memory_space<vmem>>, vector<1x128xf32>
    %152 = vector.broadcast %151 : vector<1x128xf32> to vector<16x128xf32>
    %153 = arith.mulf %150, %152 : vector<16x128xf32>
    %154 = arith.mulf %153, %153 : vector<16x128xf32>
    %cst_58 = arith.constant 1.000000e+00 : f32
    %155 = vector.broadcast %cst_58 : f32 to vector<16x128xf32>
    %156 = arith.subf %154, %155 : vector<16x128xf32>
    %cst_59 = arith.constant -5.000000e-01 : f32
    %157 = vector.broadcast %cst_59 : f32 to vector<16x128xf32>
    %158 = arith.mulf %157, %154 : vector<16x128xf32>
    %159 = math.exp %158 : vector<16x128xf32>
    %160 = arith.mulf %156, %159 : vector<16x128xf32>
    %c34_60 = arith.constant 34 : index
    %c0_61 = arith.constant 0 : index
    %161 = vector.load %arg6[%c34_60, %c0_61] : memref<49x128xf32, #tpu.memory_space<vmem>>, vector<1x128xf32>
    %162 = vector.broadcast %161 : vector<1x128xf32> to vector<16x128xf32>
    %163 = arith.mulf %160, %162 : vector<16x128xf32>
    %164 = arith.addf %127, %163 : vector<16x128xf32>
    %165 = vector.extract_strided_slice %25 {offsets = [0, 3], sizes = [16, 1], strides = [1, 1]} : vector<16x16xf32> to vector<16x1xf32>
    %166 = vector.shape_cast %165 : vector<16x1xf32> to vector<16x1xf32>
    %167 = vector.broadcast %166 : vector<16x1xf32> to vector<16x128xf32>
    %c19 = arith.constant 19 : index
    %c0_62 = arith.constant 0 : index
    %168 = vector.load %arg5[%c19, %c0_62] : memref<49x128xf32, #tpu.memory_space<vmem>>, vector<1x128xf32>
    %169 = vector.broadcast %168 : vector<1x128xf32> to vector<16x128xf32>
    %170 = arith.subf %167, %169 : vector<16x128xf32>
    %c3 = arith.constant 3 : index
    %c0_63 = arith.constant 0 : index
    %171 = vector.load %arg5[%c3, %c0_63] : memref<49x128xf32, #tpu.memory_space<vmem>>, vector<1x128xf32>
    %172 = vector.broadcast %171 : vector<1x128xf32> to vector<16x128xf32>
    %173 = arith.mulf %170, %172 : vector<16x128xf32>
    %174 = arith.mulf %173, %173 : vector<16x128xf32>
    %cst_64 = arith.constant 1.000000e+00 : f32
    %175 = vector.broadcast %cst_64 : f32 to vector<16x128xf32>
    %176 = arith.subf %174, %175 : vector<16x128xf32>
    %cst_65 = arith.constant -5.000000e-01 : f32
    %177 = vector.broadcast %cst_65 : f32 to vector<16x128xf32>
    %178 = arith.mulf %177, %174 : vector<16x128xf32>
    %179 = math.exp %178 : vector<16x128xf32>
    %180 = arith.mulf %176, %179 : vector<16x128xf32>
    %c35 = arith.constant 35 : index
    %c0_66 = arith.constant 0 : index
    %181 = vector.load %arg5[%c35, %c0_66] : memref<49x128xf32, #tpu.memory_space<vmem>>, vector<1x128xf32>
    %182 = vector.broadcast %181 : vector<1x128xf32> to vector<16x128xf32>
    %183 = arith.mulf %180, %182 : vector<16x128xf32>
    %184 = arith.addf %147, %183 : vector<16x128xf32>
    %c19_67 = arith.constant 19 : index
    %c0_68 = arith.constant 0 : index
    %185 = vector.load %arg6[%c19_67, %c0_68] : memref<49x128xf32, #tpu.memory_space<vmem>>, vector<1x128xf32>
    %186 = vector.broadcast %185 : vector<1x128xf32> to vector<16x128xf32>
    %187 = arith.subf %167, %186 : vector<16x128xf32>
    %c3_69 = arith.constant 3 : index
    %c0_70 = arith.constant 0 : index
    %188 = vector.load %arg6[%c3_69, %c0_70] : memref<49x128xf32, #tpu.memory_space<vmem>>, vector<1x128xf32>
    %189 = vector.broadcast %188 : vector<1x128xf32> to vector<16x128xf32>
    %190 = arith.mulf %187, %189 : vector<16x128xf32>
    %191 = arith.mulf %190, %190 : vector<16x128xf32>
    %cst_71 = arith.constant 1.000000e+00 : f32
    %192 = vector.broadcast %cst_71 : f32 to vector<16x128xf32>
    %193 = arith.subf %191, %192 : vector<16x128xf32>
    %cst_72 = arith.constant -5.000000e-01 : f32
    %194 = vector.broadcast %cst_72 : f32 to vector<16x128xf32>
    %195 = arith.mulf %194, %191 : vector<16x128xf32>
    %196 = math.exp %195 : vector<16x128xf32>
    %197 = arith.mulf %193, %196 : vector<16x128xf32>
    %c35_73 = arith.constant 35 : index
    %c0_74 = arith.constant 0 : index
    %198 = vector.load %arg6[%c35_73, %c0_74] : memref<49x128xf32, #tpu.memory_space<vmem>>, vector<1x128xf32>
    %199 = vector.broadcast %198 : vector<1x128xf32> to vector<16x128xf32>
    %200 = arith.mulf %197, %199 : vector<16x128xf32>
    %201 = arith.addf %164, %200 : vector<16x128xf32>
    %202 = vector.extract_strided_slice %25 {offsets = [0, 4], sizes = [16, 1], strides = [1, 1]} : vector<16x16xf32> to vector<16x1xf32>
    %203 = vector.shape_cast %202 : vector<16x1xf32> to vector<16x1xf32>
    %204 = vector.broadcast %203 : vector<16x1xf32> to vector<16x128xf32>
    %c20 = arith.constant 20 : index
    %c0_75 = arith.constant 0 : index
    %205 = vector.load %arg5[%c20, %c0_75] : memref<49x128xf32, #tpu.memory_space<vmem>>, vector<1x128xf32>
    %206 = vector.broadcast %205 : vector<1x128xf32> to vector<16x128xf32>
    %207 = arith.subf %204, %206 : vector<16x128xf32>
    %c4 = arith.constant 4 : index
    %c0_76 = arith.constant 0 : index
    %208 = vector.load %arg5[%c4, %c0_76] : memref<49x128xf32, #tpu.memory_space<vmem>>, vector<1x128xf32>
    %209 = vector.broadcast %208 : vector<1x128xf32> to vector<16x128xf32>
    %210 = arith.mulf %207, %209 : vector<16x128xf32>
    %211 = arith.mulf %210, %210 : vector<16x128xf32>
    %cst_77 = arith.constant 1.000000e+00 : f32
    %212 = vector.broadcast %cst_77 : f32 to vector<16x128xf32>
    %213 = arith.subf %211, %212 : vector<16x128xf32>
    %cst_78 = arith.constant -5.000000e-01 : f32
    %214 = vector.broadcast %cst_78 : f32 to vector<16x128xf32>
    %215 = arith.mulf %214, %211 : vector<16x128xf32>
    %216 = math.exp %215 : vector<16x128xf32>
    %217 = arith.mulf %213, %216 : vector<16x128xf32>
    %c36 = arith.constant 36 : index
    %c0_79 = arith.constant 0 : index
    %218 = vector.load %arg5[%c36, %c0_79] : memref<49x128xf32, #tpu.memory_space<vmem>>, vector<1x128xf32>
    %219 = vector.broadcast %218 : vector<1x128xf32> to vector<16x128xf32>
    %220 = arith.mulf %217, %219 : vector<16x128xf32>
    %221 = arith.addf %184, %220 : vector<16x128xf32>
    %c20_80 = arith.constant 20 : index
    %c0_81 = arith.constant 0 : index
    %222 = vector.load %arg6[%c20_80, %c0_81] : memref<49x128xf32, #tpu.memory_space<vmem>>, vector<1x128xf32>
    %223 = vector.broadcast %222 : vector<1x128xf32> to vector<16x128xf32>
    %224 = arith.subf %204, %223 : vector<16x128xf32>
    %c4_82 = arith.constant 4 : index
    %c0_83 = arith.constant 0 : index
    %225 = vector.load %arg6[%c4_82, %c0_83] : memref<49x128xf32, #tpu.memory_space<vmem>>, vector<1x128xf32>
    %226 = vector.broadcast %225 : vector<1x128xf32> to vector<16x128xf32>
    %227 = arith.mulf %224, %226 : vector<16x128xf32>
    %228 = arith.mulf %227, %227 : vector<16x128xf32>
    %cst_84 = arith.constant 1.000000e+00 : f32
    %229 = vector.broadcast %cst_84 : f32 to vector<16x128xf32>
    %230 = arith.subf %228, %229 : vector<16x128xf32>
    %cst_85 = arith.constant -5.000000e-01 : f32
    %231 = vector.broadcast %cst_85 : f32 to vector<16x128xf32>
    %232 = arith.mulf %231, %228 : vector<16x128xf32>
    %233 = math.exp %232 : vector<16x128xf32>
    %234 = arith.mulf %230, %233 : vector<16x128xf32>
    %c36_86 = arith.constant 36 : index
    %c0_87 = arith.constant 0 : index
    %235 = vector.load %arg6[%c36_86, %c0_87] : memref<49x128xf32, #tpu.memory_space<vmem>>, vector<1x128xf32>
    %236 = vector.broadcast %235 : vector<1x128xf32> to vector<16x128xf32>
    %237 = arith.mulf %234, %236 : vector<16x128xf32>
    %238 = arith.addf %201, %237 : vector<16x128xf32>
    %239 = vector.extract_strided_slice %25 {offsets = [0, 5], sizes = [16, 1], strides = [1, 1]} : vector<16x16xf32> to vector<16x1xf32>
    %240 = vector.shape_cast %239 : vector<16x1xf32> to vector<16x1xf32>
    %241 = vector.broadcast %240 : vector<16x1xf32> to vector<16x128xf32>
    %c21 = arith.constant 21 : index
    %c0_88 = arith.constant 0 : index
    %242 = vector.load %arg5[%c21, %c0_88] : memref<49x128xf32, #tpu.memory_space<vmem>>, vector<1x128xf32>
    %243 = vector.broadcast %242 : vector<1x128xf32> to vector<16x128xf32>
    %244 = arith.subf %241, %243 : vector<16x128xf32>
    %c5 = arith.constant 5 : index
    %c0_89 = arith.constant 0 : index
    %245 = vector.load %arg5[%c5, %c0_89] : memref<49x128xf32, #tpu.memory_space<vmem>>, vector<1x128xf32>
    %246 = vector.broadcast %245 : vector<1x128xf32> to vector<16x128xf32>
    %247 = arith.mulf %244, %246 : vector<16x128xf32>
    %248 = arith.mulf %247, %247 : vector<16x128xf32>
    %cst_90 = arith.constant 1.000000e+00 : f32
    %249 = vector.broadcast %cst_90 : f32 to vector<16x128xf32>
    %250 = arith.subf %248, %249 : vector<16x128xf32>
    %cst_91 = arith.constant -5.000000e-01 : f32
    %251 = vector.broadcast %cst_91 : f32 to vector<16x128xf32>
    %252 = arith.mulf %251, %248 : vector<16x128xf32>
    %253 = math.exp %252 : vector<16x128xf32>
    %254 = arith.mulf %250, %253 : vector<16x128xf32>
    %c37 = arith.constant 37 : index
    %c0_92 = arith.constant 0 : index
    %255 = vector.load %arg5[%c37, %c0_92] : memref<49x128xf32, #tpu.memory_space<vmem>>, vector<1x128xf32>
    %256 = vector.broadcast %255 : vector<1x128xf32> to vector<16x128xf32>
    %257 = arith.mulf %254, %256 : vector<16x128xf32>
    %258 = arith.addf %221, %257 : vector<16x128xf32>
    %c21_93 = arith.constant 21 : index
    %c0_94 = arith.constant 0 : index
    %259 = vector.load %arg6[%c21_93, %c0_94] : memref<49x128xf32, #tpu.memory_space<vmem>>, vector<1x128xf32>
    %260 = vector.broadcast %259 : vector<1x128xf32> to vector<16x128xf32>
    %261 = arith.subf %241, %260 : vector<16x128xf32>
    %c5_95 = arith.constant 5 : index
    %c0_96 = arith.constant 0 : index
    %262 = vector.load %arg6[%c5_95, %c0_96] : memref<49x128xf32, #tpu.memory_space<vmem>>, vector<1x128xf32>
    %263 = vector.broadcast %262 : vector<1x128xf32> to vector<16x128xf32>
    %264 = arith.mulf %261, %263 : vector<16x128xf32>
    %265 = arith.mulf %264, %264 : vector<16x128xf32>
    %cst_97 = arith.constant 1.000000e+00 : f32
    %266 = vector.broadcast %cst_97 : f32 to vector<16x128xf32>
    %267 = arith.subf %265, %266 : vector<16x128xf32>
    %cst_98 = arith.constant -5.000000e-01 : f32
    %268 = vector.broadcast %cst_98 : f32 to vector<16x128xf32>
    %269 = arith.mulf %268, %265 : vector<16x128xf32>
    %270 = math.exp %269 : vector<16x128xf32>
    %271 = arith.mulf %267, %270 : vector<16x128xf32>
    %c37_99 = arith.constant 37 : index
    %c0_100 = arith.constant 0 : index
    %272 = vector.load %arg6[%c37_99, %c0_100] : memref<49x128xf32, #tpu.memory_space<vmem>>, vector<1x128xf32>
    %273 = vector.broadcast %272 : vector<1x128xf32> to vector<16x128xf32>
    %274 = arith.mulf %271, %273 : vector<16x128xf32>
    %275 = arith.addf %238, %274 : vector<16x128xf32>
    %276 = vector.extract_strided_slice %25 {offsets = [0, 6], sizes = [16, 1], strides = [1, 1]} : vector<16x16xf32> to vector<16x1xf32>
    %277 = vector.shape_cast %276 : vector<16x1xf32> to vector<16x1xf32>
    %278 = vector.broadcast %277 : vector<16x1xf32> to vector<16x128xf32>
    %c22 = arith.constant 22 : index
    %c0_101 = arith.constant 0 : index
    %279 = vector.load %arg5[%c22, %c0_101] : memref<49x128xf32, #tpu.memory_space<vmem>>, vector<1x128xf32>
    %280 = vector.broadcast %279 : vector<1x128xf32> to vector<16x128xf32>
    %281 = arith.subf %278, %280 : vector<16x128xf32>
    %c6 = arith.constant 6 : index
    %c0_102 = arith.constant 0 : index
    %282 = vector.load %arg5[%c6, %c0_102] : memref<49x128xf32, #tpu.memory_space<vmem>>, vector<1x128xf32>
    %283 = vector.broadcast %282 : vector<1x128xf32> to vector<16x128xf32>
    %284 = arith.mulf %281, %283 : vector<16x128xf32>
    %285 = arith.mulf %284, %284 : vector<16x128xf32>
    %cst_103 = arith.constant 1.000000e+00 : f32
    %286 = vector.broadcast %cst_103 : f32 to vector<16x128xf32>
    %287 = arith.subf %285, %286 : vector<16x128xf32>
    %cst_104 = arith.constant -5.000000e-01 : f32
    %288 = vector.broadcast %cst_104 : f32 to vector<16x128xf32>
    %289 = arith.mulf %288, %285 : vector<16x128xf32>
    %290 = math.exp %289 : vector<16x128xf32>
    %291 = arith.mulf %287, %290 : vector<16x128xf32>
    %c38 = arith.constant 38 : index
    %c0_105 = arith.constant 0 : index
    %292 = vector.load %arg5[%c38, %c0_105] : memref<49x128xf32, #tpu.memory_space<vmem>>, vector<1x128xf32>
    %293 = vector.broadcast %292 : vector<1x128xf32> to vector<16x128xf32>
    %294 = arith.mulf %291, %293 : vector<16x128xf32>
    %295 = arith.addf %258, %294 : vector<16x128xf32>
    %c22_106 = arith.constant 22 : index
    %c0_107 = arith.constant 0 : index
    %296 = vector.load %arg6[%c22_106, %c0_107] : memref<49x128xf32, #tpu.memory_space<vmem>>, vector<1x128xf32>
    %297 = vector.broadcast %296 : vector<1x128xf32> to vector<16x128xf32>
    %298 = arith.subf %278, %297 : vector<16x128xf32>
    %c6_108 = arith.constant 6 : index
    %c0_109 = arith.constant 0 : index
    %299 = vector.load %arg6[%c6_108, %c0_109] : memref<49x128xf32, #tpu.memory_space<vmem>>, vector<1x128xf32>
    %300 = vector.broadcast %299 : vector<1x128xf32> to vector<16x128xf32>
    %301 = arith.mulf %298, %300 : vector<16x128xf32>
    %302 = arith.mulf %301, %301 : vector<16x128xf32>
    %cst_110 = arith.constant 1.000000e+00 : f32
    %303 = vector.broadcast %cst_110 : f32 to vector<16x128xf32>
    %304 = arith.subf %302, %303 : vector<16x128xf32>
    %cst_111 = arith.constant -5.000000e-01 : f32
    %305 = vector.broadcast %cst_111 : f32 to vector<16x128xf32>
    %306 = arith.mulf %305, %302 : vector<16x128xf32>
    %307 = math.exp %306 : vector<16x128xf32>
    %308 = arith.mulf %304, %307 : vector<16x128xf32>
    %c38_112 = arith.constant 38 : index
    %c0_113 = arith.constant 0 : index
    %309 = vector.load %arg6[%c38_112, %c0_113] : memref<49x128xf32, #tpu.memory_space<vmem>>, vector<1x128xf32>
    %310 = vector.broadcast %309 : vector<1x128xf32> to vector<16x128xf32>
    %311 = arith.mulf %308, %310 : vector<16x128xf32>
    %312 = arith.addf %275, %311 : vector<16x128xf32>
    %313 = vector.extract_strided_slice %25 {offsets = [0, 7], sizes = [16, 1], strides = [1, 1]} : vector<16x16xf32> to vector<16x1xf32>
    %314 = vector.shape_cast %313 : vector<16x1xf32> to vector<16x1xf32>
    %315 = vector.broadcast %314 : vector<16x1xf32> to vector<16x128xf32>
    %c23 = arith.constant 23 : index
    %c0_114 = arith.constant 0 : index
    %316 = vector.load %arg5[%c23, %c0_114] : memref<49x128xf32, #tpu.memory_space<vmem>>, vector<1x128xf32>
    %317 = vector.broadcast %316 : vector<1x128xf32> to vector<16x128xf32>
    %318 = arith.subf %315, %317 : vector<16x128xf32>
    %c7 = arith.constant 7 : index
    %c0_115 = arith.constant 0 : index
    %319 = vector.load %arg5[%c7, %c0_115] : memref<49x128xf32, #tpu.memory_space<vmem>>, vector<1x128xf32>
    %320 = vector.broadcast %319 : vector<1x128xf32> to vector<16x128xf32>
    %321 = arith.mulf %318, %320 : vector<16x128xf32>
    %322 = arith.mulf %321, %321 : vector<16x128xf32>
    %cst_116 = arith.constant 1.000000e+00 : f32
    %323 = vector.broadcast %cst_116 : f32 to vector<16x128xf32>
    %324 = arith.subf %322, %323 : vector<16x128xf32>
    %cst_117 = arith.constant -5.000000e-01 : f32
    %325 = vector.broadcast %cst_117 : f32 to vector<16x128xf32>
    %326 = arith.mulf %325, %322 : vector<16x128xf32>
    %327 = math.exp %326 : vector<16x128xf32>
    %328 = arith.mulf %324, %327 : vector<16x128xf32>
    %c39 = arith.constant 39 : index
    %c0_118 = arith.constant 0 : index
    %329 = vector.load %arg5[%c39, %c0_118] : memref<49x128xf32, #tpu.memory_space<vmem>>, vector<1x128xf32>
    %330 = vector.broadcast %329 : vector<1x128xf32> to vector<16x128xf32>
    %331 = arith.mulf %328, %330 : vector<16x128xf32>
    %332 = arith.addf %295, %331 : vector<16x128xf32>
    %c23_119 = arith.constant 23 : index
    %c0_120 = arith.constant 0 : index
    %333 = vector.load %arg6[%c23_119, %c0_120] : memref<49x128xf32, #tpu.memory_space<vmem>>, vector<1x128xf32>
    %334 = vector.broadcast %333 : vector<1x128xf32> to vector<16x128xf32>
    %335 = arith.subf %315, %334 : vector<16x128xf32>
    %c7_121 = arith.constant 7 : index
    %c0_122 = arith.constant 0 : index
    %336 = vector.load %arg6[%c7_121, %c0_122] : memref<49x128xf32, #tpu.memory_space<vmem>>, vector<1x128xf32>
    %337 = vector.broadcast %336 : vector<1x128xf32> to vector<16x128xf32>
    %338 = arith.mulf %335, %337 : vector<16x128xf32>
    %339 = arith.mulf %338, %338 : vector<16x128xf32>
    %cst_123 = arith.constant 1.000000e+00 : f32
    %340 = vector.broadcast %cst_123 : f32 to vector<16x128xf32>
    %341 = arith.subf %339, %340 : vector<16x128xf32>
    %cst_124 = arith.constant -5.000000e-01 : f32
    %342 = vector.broadcast %cst_124 : f32 to vector<16x128xf32>
    %343 = arith.mulf %342, %339 : vector<16x128xf32>
    %344 = math.exp %343 : vector<16x128xf32>
    %345 = arith.mulf %341, %344 : vector<16x128xf32>
    %c39_125 = arith.constant 39 : index
    %c0_126 = arith.constant 0 : index
    %346 = vector.load %arg6[%c39_125, %c0_126] : memref<49x128xf32, #tpu.memory_space<vmem>>, vector<1x128xf32>
    %347 = vector.broadcast %346 : vector<1x128xf32> to vector<16x128xf32>
    %348 = arith.mulf %345, %347 : vector<16x128xf32>
    %349 = arith.addf %312, %348 : vector<16x128xf32>
    %350 = vector.extract_strided_slice %25 {offsets = [0, 8], sizes = [16, 1], strides = [1, 1]} : vector<16x16xf32> to vector<16x1xf32>
    %351 = vector.shape_cast %350 : vector<16x1xf32> to vector<16x1xf32>
    %352 = vector.broadcast %351 : vector<16x1xf32> to vector<16x128xf32>
    %c24 = arith.constant 24 : index
    %c0_127 = arith.constant 0 : index
    %353 = vector.load %arg5[%c24, %c0_127] : memref<49x128xf32, #tpu.memory_space<vmem>>, vector<1x128xf32>
    %354 = vector.broadcast %353 : vector<1x128xf32> to vector<16x128xf32>
    %355 = arith.subf %352, %354 : vector<16x128xf32>
    %c8 = arith.constant 8 : index
    %c0_128 = arith.constant 0 : index
    %356 = vector.load %arg5[%c8, %c0_128] : memref<49x128xf32, #tpu.memory_space<vmem>>, vector<1x128xf32>
    %357 = vector.broadcast %356 : vector<1x128xf32> to vector<16x128xf32>
    %358 = arith.mulf %355, %357 : vector<16x128xf32>
    %359 = arith.mulf %358, %358 : vector<16x128xf32>
    %cst_129 = arith.constant 1.000000e+00 : f32
    %360 = vector.broadcast %cst_129 : f32 to vector<16x128xf32>
    %361 = arith.subf %359, %360 : vector<16x128xf32>
    %cst_130 = arith.constant -5.000000e-01 : f32
    %362 = vector.broadcast %cst_130 : f32 to vector<16x128xf32>
    %363 = arith.mulf %362, %359 : vector<16x128xf32>
    %364 = math.exp %363 : vector<16x128xf32>
    %365 = arith.mulf %361, %364 : vector<16x128xf32>
    %c40 = arith.constant 40 : index
    %c0_131 = arith.constant 0 : index
    %366 = vector.load %arg5[%c40, %c0_131] : memref<49x128xf32, #tpu.memory_space<vmem>>, vector<1x128xf32>
    %367 = vector.broadcast %366 : vector<1x128xf32> to vector<16x128xf32>
    %368 = arith.mulf %365, %367 : vector<16x128xf32>
    %369 = arith.addf %332, %368 : vector<16x128xf32>
    %c24_132 = arith.constant 24 : index
    %c0_133 = arith.constant 0 : index
    %370 = vector.load %arg6[%c24_132, %c0_133] : memref<49x128xf32, #tpu.memory_space<vmem>>, vector<1x128xf32>
    %371 = vector.broadcast %370 : vector<1x128xf32> to vector<16x128xf32>
    %372 = arith.subf %352, %371 : vector<16x128xf32>
    %c8_134 = arith.constant 8 : index
    %c0_135 = arith.constant 0 : index
    %373 = vector.load %arg6[%c8_134, %c0_135] : memref<49x128xf32, #tpu.memory_space<vmem>>, vector<1x128xf32>
    %374 = vector.broadcast %373 : vector<1x128xf32> to vector<16x128xf32>
    %375 = arith.mulf %372, %374 : vector<16x128xf32>
    %376 = arith.mulf %375, %375 : vector<16x128xf32>
    %cst_136 = arith.constant 1.000000e+00 : f32
    %377 = vector.broadcast %cst_136 : f32 to vector<16x128xf32>
    %378 = arith.subf %376, %377 : vector<16x128xf32>
    %cst_137 = arith.constant -5.000000e-01 : f32
    %379 = vector.broadcast %cst_137 : f32 to vector<16x128xf32>
    %380 = arith.mulf %379, %376 : vector<16x128xf32>
    %381 = math.exp %380 : vector<16x128xf32>
    %382 = arith.mulf %378, %381 : vector<16x128xf32>
    %c40_138 = arith.constant 40 : index
    %c0_139 = arith.constant 0 : index
    %383 = vector.load %arg6[%c40_138, %c0_139] : memref<49x128xf32, #tpu.memory_space<vmem>>, vector<1x128xf32>
    %384 = vector.broadcast %383 : vector<1x128xf32> to vector<16x128xf32>
    %385 = arith.mulf %382, %384 : vector<16x128xf32>
    %386 = arith.addf %349, %385 : vector<16x128xf32>
    %387 = vector.extract_strided_slice %25 {offsets = [0, 9], sizes = [16, 1], strides = [1, 1]} : vector<16x16xf32> to vector<16x1xf32>
    %388 = vector.shape_cast %387 : vector<16x1xf32> to vector<16x1xf32>
    %389 = vector.broadcast %388 : vector<16x1xf32> to vector<16x128xf32>
    %c25 = arith.constant 25 : index
    %c0_140 = arith.constant 0 : index
    %390 = vector.load %arg5[%c25, %c0_140] : memref<49x128xf32, #tpu.memory_space<vmem>>, vector<1x128xf32>
    %391 = vector.broadcast %390 : vector<1x128xf32> to vector<16x128xf32>
    %392 = arith.subf %389, %391 : vector<16x128xf32>
    %c9 = arith.constant 9 : index
    %c0_141 = arith.constant 0 : index
    %393 = vector.load %arg5[%c9, %c0_141] : memref<49x128xf32, #tpu.memory_space<vmem>>, vector<1x128xf32>
    %394 = vector.broadcast %393 : vector<1x128xf32> to vector<16x128xf32>
    %395 = arith.mulf %392, %394 : vector<16x128xf32>
    %396 = arith.mulf %395, %395 : vector<16x128xf32>
    %cst_142 = arith.constant 1.000000e+00 : f32
    %397 = vector.broadcast %cst_142 : f32 to vector<16x128xf32>
    %398 = arith.subf %396, %397 : vector<16x128xf32>
    %cst_143 = arith.constant -5.000000e-01 : f32
    %399 = vector.broadcast %cst_143 : f32 to vector<16x128xf32>
    %400 = arith.mulf %399, %396 : vector<16x128xf32>
    %401 = math.exp %400 : vector<16x128xf32>
    %402 = arith.mulf %398, %401 : vector<16x128xf32>
    %c41 = arith.constant 41 : index
    %c0_144 = arith.constant 0 : index
    %403 = vector.load %arg5[%c41, %c0_144] : memref<49x128xf32, #tpu.memory_space<vmem>>, vector<1x128xf32>
    %404 = vector.broadcast %403 : vector<1x128xf32> to vector<16x128xf32>
    %405 = arith.mulf %402, %404 : vector<16x128xf32>
    %406 = arith.addf %369, %405 : vector<16x128xf32>
    %c25_145 = arith.constant 25 : index
    %c0_146 = arith.constant 0 : index
    %407 = vector.load %arg6[%c25_145, %c0_146] : memref<49x128xf32, #tpu.memory_space<vmem>>, vector<1x128xf32>
    %408 = vector.broadcast %407 : vector<1x128xf32> to vector<16x128xf32>
    %409 = arith.subf %389, %408 : vector<16x128xf32>
    %c9_147 = arith.constant 9 : index
    %c0_148 = arith.constant 0 : index
    %410 = vector.load %arg6[%c9_147, %c0_148] : memref<49x128xf32, #tpu.memory_space<vmem>>, vector<1x128xf32>
    %411 = vector.broadcast %410 : vector<1x128xf32> to vector<16x128xf32>
    %412 = arith.mulf %409, %411 : vector<16x128xf32>
    %413 = arith.mulf %412, %412 : vector<16x128xf32>
    %cst_149 = arith.constant 1.000000e+00 : f32
    %414 = vector.broadcast %cst_149 : f32 to vector<16x128xf32>
    %415 = arith.subf %413, %414 : vector<16x128xf32>
    %cst_150 = arith.constant -5.000000e-01 : f32
    %416 = vector.broadcast %cst_150 : f32 to vector<16x128xf32>
    %417 = arith.mulf %416, %413 : vector<16x128xf32>
    %418 = math.exp %417 : vector<16x128xf32>
    %419 = arith.mulf %415, %418 : vector<16x128xf32>
    %c41_151 = arith.constant 41 : index
    %c0_152 = arith.constant 0 : index
    %420 = vector.load %arg6[%c41_151, %c0_152] : memref<49x128xf32, #tpu.memory_space<vmem>>, vector<1x128xf32>
    %421 = vector.broadcast %420 : vector<1x128xf32> to vector<16x128xf32>
    %422 = arith.mulf %419, %421 : vector<16x128xf32>
    %423 = arith.addf %386, %422 : vector<16x128xf32>
    %424 = vector.extract_strided_slice %25 {offsets = [0, 10], sizes = [16, 1], strides = [1, 1]} : vector<16x16xf32> to vector<16x1xf32>
    %425 = vector.shape_cast %424 : vector<16x1xf32> to vector<16x1xf32>
    %426 = vector.broadcast %425 : vector<16x1xf32> to vector<16x128xf32>
    %c26 = arith.constant 26 : index
    %c0_153 = arith.constant 0 : index
    %427 = vector.load %arg5[%c26, %c0_153] : memref<49x128xf32, #tpu.memory_space<vmem>>, vector<1x128xf32>
    %428 = vector.broadcast %427 : vector<1x128xf32> to vector<16x128xf32>
    %429 = arith.subf %426, %428 : vector<16x128xf32>
    %c10 = arith.constant 10 : index
    %c0_154 = arith.constant 0 : index
    %430 = vector.load %arg5[%c10, %c0_154] : memref<49x128xf32, #tpu.memory_space<vmem>>, vector<1x128xf32>
    %431 = vector.broadcast %430 : vector<1x128xf32> to vector<16x128xf32>
    %432 = arith.mulf %429, %431 : vector<16x128xf32>
    %433 = arith.mulf %432, %432 : vector<16x128xf32>
    %cst_155 = arith.constant 1.000000e+00 : f32
    %434 = vector.broadcast %cst_155 : f32 to vector<16x128xf32>
    %435 = arith.subf %433, %434 : vector<16x128xf32>
    %cst_156 = arith.constant -5.000000e-01 : f32
    %436 = vector.broadcast %cst_156 : f32 to vector<16x128xf32>
    %437 = arith.mulf %436, %433 : vector<16x128xf32>
    %438 = math.exp %437 : vector<16x128xf32>
    %439 = arith.mulf %435, %438 : vector<16x128xf32>
    %c42 = arith.constant 42 : index
    %c0_157 = arith.constant 0 : index
    %440 = vector.load %arg5[%c42, %c0_157] : memref<49x128xf32, #tpu.memory_space<vmem>>, vector<1x128xf32>
    %441 = vector.broadcast %440 : vector<1x128xf32> to vector<16x128xf32>
    %442 = arith.mulf %439, %441 : vector<16x128xf32>
    %443 = arith.addf %406, %442 : vector<16x128xf32>
    %c26_158 = arith.constant 26 : index
    %c0_159 = arith.constant 0 : index
    %444 = vector.load %arg6[%c26_158, %c0_159] : memref<49x128xf32, #tpu.memory_space<vmem>>, vector<1x128xf32>
    %445 = vector.broadcast %444 : vector<1x128xf32> to vector<16x128xf32>
    %446 = arith.subf %426, %445 : vector<16x128xf32>
    %c10_160 = arith.constant 10 : index
    %c0_161 = arith.constant 0 : index
    %447 = vector.load %arg6[%c10_160, %c0_161] : memref<49x128xf32, #tpu.memory_space<vmem>>, vector<1x128xf32>
    %448 = vector.broadcast %447 : vector<1x128xf32> to vector<16x128xf32>
    %449 = arith.mulf %446, %448 : vector<16x128xf32>
    %450 = arith.mulf %449, %449 : vector<16x128xf32>
    %cst_162 = arith.constant 1.000000e+00 : f32
    %451 = vector.broadcast %cst_162 : f32 to vector<16x128xf32>
    %452 = arith.subf %450, %451 : vector<16x128xf32>
    %cst_163 = arith.constant -5.000000e-01 : f32
    %453 = vector.broadcast %cst_163 : f32 to vector<16x128xf32>
    %454 = arith.mulf %453, %450 : vector<16x128xf32>
    %455 = math.exp %454 : vector<16x128xf32>
    %456 = arith.mulf %452, %455 : vector<16x128xf32>
    %c42_164 = arith.constant 42 : index
    %c0_165 = arith.constant 0 : index
    %457 = vector.load %arg6[%c42_164, %c0_165] : memref<49x128xf32, #tpu.memory_space<vmem>>, vector<1x128xf32>
    %458 = vector.broadcast %457 : vector<1x128xf32> to vector<16x128xf32>
    %459 = arith.mulf %456, %458 : vector<16x128xf32>
    %460 = arith.addf %423, %459 : vector<16x128xf32>
    %461 = vector.extract_strided_slice %25 {offsets = [0, 11], sizes = [16, 1], strides = [1, 1]} : vector<16x16xf32> to vector<16x1xf32>
    %462 = vector.shape_cast %461 : vector<16x1xf32> to vector<16x1xf32>
    %463 = vector.broadcast %462 : vector<16x1xf32> to vector<16x128xf32>
    %c27 = arith.constant 27 : index
    %c0_166 = arith.constant 0 : index
    %464 = vector.load %arg5[%c27, %c0_166] : memref<49x128xf32, #tpu.memory_space<vmem>>, vector<1x128xf32>
    %465 = vector.broadcast %464 : vector<1x128xf32> to vector<16x128xf32>
    %466 = arith.subf %463, %465 : vector<16x128xf32>
    %c11 = arith.constant 11 : index
    %c0_167 = arith.constant 0 : index
    %467 = vector.load %arg5[%c11, %c0_167] : memref<49x128xf32, #tpu.memory_space<vmem>>, vector<1x128xf32>
    %468 = vector.broadcast %467 : vector<1x128xf32> to vector<16x128xf32>
    %469 = arith.mulf %466, %468 : vector<16x128xf32>
    %470 = arith.mulf %469, %469 : vector<16x128xf32>
    %cst_168 = arith.constant 1.000000e+00 : f32
    %471 = vector.broadcast %cst_168 : f32 to vector<16x128xf32>
    %472 = arith.subf %470, %471 : vector<16x128xf32>
    %cst_169 = arith.constant -5.000000e-01 : f32
    %473 = vector.broadcast %cst_169 : f32 to vector<16x128xf32>
    %474 = arith.mulf %473, %470 : vector<16x128xf32>
    %475 = math.exp %474 : vector<16x128xf32>
    %476 = arith.mulf %472, %475 : vector<16x128xf32>
    %c43 = arith.constant 43 : index
    %c0_170 = arith.constant 0 : index
    %477 = vector.load %arg5[%c43, %c0_170] : memref<49x128xf32, #tpu.memory_space<vmem>>, vector<1x128xf32>
    %478 = vector.broadcast %477 : vector<1x128xf32> to vector<16x128xf32>
    %479 = arith.mulf %476, %478 : vector<16x128xf32>
    %480 = arith.addf %443, %479 : vector<16x128xf32>
    %c27_171 = arith.constant 27 : index
    %c0_172 = arith.constant 0 : index
    %481 = vector.load %arg6[%c27_171, %c0_172] : memref<49x128xf32, #tpu.memory_space<vmem>>, vector<1x128xf32>
    %482 = vector.broadcast %481 : vector<1x128xf32> to vector<16x128xf32>
    %483 = arith.subf %463, %482 : vector<16x128xf32>
    %c11_173 = arith.constant 11 : index
    %c0_174 = arith.constant 0 : index
    %484 = vector.load %arg6[%c11_173, %c0_174] : memref<49x128xf32, #tpu.memory_space<vmem>>, vector<1x128xf32>
    %485 = vector.broadcast %484 : vector<1x128xf32> to vector<16x128xf32>
    %486 = arith.mulf %483, %485 : vector<16x128xf32>
    %487 = arith.mulf %486, %486 : vector<16x128xf32>
    %cst_175 = arith.constant 1.000000e+00 : f32
    %488 = vector.broadcast %cst_175 : f32 to vector<16x128xf32>
    %489 = arith.subf %487, %488 : vector<16x128xf32>
    %cst_176 = arith.constant -5.000000e-01 : f32
    %490 = vector.broadcast %cst_176 : f32 to vector<16x128xf32>
    %491 = arith.mulf %490, %487 : vector<16x128xf32>
    %492 = math.exp %491 : vector<16x128xf32>
    %493 = arith.mulf %489, %492 : vector<16x128xf32>
    %c43_177 = arith.constant 43 : index
    %c0_178 = arith.constant 0 : index
    %494 = vector.load %arg6[%c43_177, %c0_178] : memref<49x128xf32, #tpu.memory_space<vmem>>, vector<1x128xf32>
    %495 = vector.broadcast %494 : vector<1x128xf32> to vector<16x128xf32>
    %496 = arith.mulf %493, %495 : vector<16x128xf32>
    %497 = arith.addf %460, %496 : vector<16x128xf32>
    %498 = vector.extract_strided_slice %25 {offsets = [0, 12], sizes = [16, 1], strides = [1, 1]} : vector<16x16xf32> to vector<16x1xf32>
    %499 = vector.shape_cast %498 : vector<16x1xf32> to vector<16x1xf32>
    %500 = vector.broadcast %499 : vector<16x1xf32> to vector<16x128xf32>
    %c28 = arith.constant 28 : index
    %c0_179 = arith.constant 0 : index
    %501 = vector.load %arg5[%c28, %c0_179] : memref<49x128xf32, #tpu.memory_space<vmem>>, vector<1x128xf32>
    %502 = vector.broadcast %501 : vector<1x128xf32> to vector<16x128xf32>
    %503 = arith.subf %500, %502 : vector<16x128xf32>
    %c12 = arith.constant 12 : index
    %c0_180 = arith.constant 0 : index
    %504 = vector.load %arg5[%c12, %c0_180] : memref<49x128xf32, #tpu.memory_space<vmem>>, vector<1x128xf32>
    %505 = vector.broadcast %504 : vector<1x128xf32> to vector<16x128xf32>
    %506 = arith.mulf %503, %505 : vector<16x128xf32>
    %507 = arith.mulf %506, %506 : vector<16x128xf32>
    %cst_181 = arith.constant 1.000000e+00 : f32
    %508 = vector.broadcast %cst_181 : f32 to vector<16x128xf32>
    %509 = arith.subf %507, %508 : vector<16x128xf32>
    %cst_182 = arith.constant -5.000000e-01 : f32
    %510 = vector.broadcast %cst_182 : f32 to vector<16x128xf32>
    %511 = arith.mulf %510, %507 : vector<16x128xf32>
    %512 = math.exp %511 : vector<16x128xf32>
    %513 = arith.mulf %509, %512 : vector<16x128xf32>
    %c44 = arith.constant 44 : index
    %c0_183 = arith.constant 0 : index
    %514 = vector.load %arg5[%c44, %c0_183] : memref<49x128xf32, #tpu.memory_space<vmem>>, vector<1x128xf32>
    %515 = vector.broadcast %514 : vector<1x128xf32> to vector<16x128xf32>
    %516 = arith.mulf %513, %515 : vector<16x128xf32>
    %517 = arith.addf %480, %516 : vector<16x128xf32>
    %c28_184 = arith.constant 28 : index
    %c0_185 = arith.constant 0 : index
    %518 = vector.load %arg6[%c28_184, %c0_185] : memref<49x128xf32, #tpu.memory_space<vmem>>, vector<1x128xf32>
    %519 = vector.broadcast %518 : vector<1x128xf32> to vector<16x128xf32>
    %520 = arith.subf %500, %519 : vector<16x128xf32>
    %c12_186 = arith.constant 12 : index
    %c0_187 = arith.constant 0 : index
    %521 = vector.load %arg6[%c12_186, %c0_187] : memref<49x128xf32, #tpu.memory_space<vmem>>, vector<1x128xf32>
    %522 = vector.broadcast %521 : vector<1x128xf32> to vector<16x128xf32>
    %523 = arith.mulf %520, %522 : vector<16x128xf32>
    %524 = arith.mulf %523, %523 : vector<16x128xf32>
    %cst_188 = arith.constant 1.000000e+00 : f32
    %525 = vector.broadcast %cst_188 : f32 to vector<16x128xf32>
    %526 = arith.subf %524, %525 : vector<16x128xf32>
    %cst_189 = arith.constant -5.000000e-01 : f32
    %527 = vector.broadcast %cst_189 : f32 to vector<16x128xf32>
    %528 = arith.mulf %527, %524 : vector<16x128xf32>
    %529 = math.exp %528 : vector<16x128xf32>
    %530 = arith.mulf %526, %529 : vector<16x128xf32>
    %c44_190 = arith.constant 44 : index
    %c0_191 = arith.constant 0 : index
    %531 = vector.load %arg6[%c44_190, %c0_191] : memref<49x128xf32, #tpu.memory_space<vmem>>, vector<1x128xf32>
    %532 = vector.broadcast %531 : vector<1x128xf32> to vector<16x128xf32>
    %533 = arith.mulf %530, %532 : vector<16x128xf32>
    %534 = arith.addf %497, %533 : vector<16x128xf32>
    %535 = vector.extract_strided_slice %25 {offsets = [0, 13], sizes = [16, 1], strides = [1, 1]} : vector<16x16xf32> to vector<16x1xf32>
    %536 = vector.shape_cast %535 : vector<16x1xf32> to vector<16x1xf32>
    %537 = vector.broadcast %536 : vector<16x1xf32> to vector<16x128xf32>
    %c29 = arith.constant 29 : index
    %c0_192 = arith.constant 0 : index
    %538 = vector.load %arg5[%c29, %c0_192] : memref<49x128xf32, #tpu.memory_space<vmem>>, vector<1x128xf32>
    %539 = vector.broadcast %538 : vector<1x128xf32> to vector<16x128xf32>
    %540 = arith.subf %537, %539 : vector<16x128xf32>
    %c13 = arith.constant 13 : index
    %c0_193 = arith.constant 0 : index
    %541 = vector.load %arg5[%c13, %c0_193] : memref<49x128xf32, #tpu.memory_space<vmem>>, vector<1x128xf32>
    %542 = vector.broadcast %541 : vector<1x128xf32> to vector<16x128xf32>
    %543 = arith.mulf %540, %542 : vector<16x128xf32>
    %544 = arith.mulf %543, %543 : vector<16x128xf32>
    %cst_194 = arith.constant 1.000000e+00 : f32
    %545 = vector.broadcast %cst_194 : f32 to vector<16x128xf32>
    %546 = arith.subf %544, %545 : vector<16x128xf32>
    %cst_195 = arith.constant -5.000000e-01 : f32
    %547 = vector.broadcast %cst_195 : f32 to vector<16x128xf32>
    %548 = arith.mulf %547, %544 : vector<16x128xf32>
    %549 = math.exp %548 : vector<16x128xf32>
    %550 = arith.mulf %546, %549 : vector<16x128xf32>
    %c45 = arith.constant 45 : index
    %c0_196 = arith.constant 0 : index
    %551 = vector.load %arg5[%c45, %c0_196] : memref<49x128xf32, #tpu.memory_space<vmem>>, vector<1x128xf32>
    %552 = vector.broadcast %551 : vector<1x128xf32> to vector<16x128xf32>
    %553 = arith.mulf %550, %552 : vector<16x128xf32>
    %554 = arith.addf %517, %553 : vector<16x128xf32>
    %c29_197 = arith.constant 29 : index
    %c0_198 = arith.constant 0 : index
    %555 = vector.load %arg6[%c29_197, %c0_198] : memref<49x128xf32, #tpu.memory_space<vmem>>, vector<1x128xf32>
    %556 = vector.broadcast %555 : vector<1x128xf32> to vector<16x128xf32>
    %557 = arith.subf %537, %556 : vector<16x128xf32>
    %c13_199 = arith.constant 13 : index
    %c0_200 = arith.constant 0 : index
    %558 = vector.load %arg6[%c13_199, %c0_200] : memref<49x128xf32, #tpu.memory_space<vmem>>, vector<1x128xf32>
    %559 = vector.broadcast %558 : vector<1x128xf32> to vector<16x128xf32>
    %560 = arith.mulf %557, %559 : vector<16x128xf32>
    %561 = arith.mulf %560, %560 : vector<16x128xf32>
    %cst_201 = arith.constant 1.000000e+00 : f32
    %562 = vector.broadcast %cst_201 : f32 to vector<16x128xf32>
    %563 = arith.subf %561, %562 : vector<16x128xf32>
    %cst_202 = arith.constant -5.000000e-01 : f32
    %564 = vector.broadcast %cst_202 : f32 to vector<16x128xf32>
    %565 = arith.mulf %564, %561 : vector<16x128xf32>
    %566 = math.exp %565 : vector<16x128xf32>
    %567 = arith.mulf %563, %566 : vector<16x128xf32>
    %c45_203 = arith.constant 45 : index
    %c0_204 = arith.constant 0 : index
    %568 = vector.load %arg6[%c45_203, %c0_204] : memref<49x128xf32, #tpu.memory_space<vmem>>, vector<1x128xf32>
    %569 = vector.broadcast %568 : vector<1x128xf32> to vector<16x128xf32>
    %570 = arith.mulf %567, %569 : vector<16x128xf32>
    %571 = arith.addf %534, %570 : vector<16x128xf32>
    %572 = vector.extract_strided_slice %25 {offsets = [0, 14], sizes = [16, 1], strides = [1, 1]} : vector<16x16xf32> to vector<16x1xf32>
    %573 = vector.shape_cast %572 : vector<16x1xf32> to vector<16x1xf32>
    %574 = vector.broadcast %573 : vector<16x1xf32> to vector<16x128xf32>
    %c30 = arith.constant 30 : index
    %c0_205 = arith.constant 0 : index
    %575 = vector.load %arg5[%c30, %c0_205] : memref<49x128xf32, #tpu.memory_space<vmem>>, vector<1x128xf32>
    %576 = vector.broadcast %575 : vector<1x128xf32> to vector<16x128xf32>
    %577 = arith.subf %574, %576 : vector<16x128xf32>
    %c14 = arith.constant 14 : index
    %c0_206 = arith.constant 0 : index
    %578 = vector.load %arg5[%c14, %c0_206] : memref<49x128xf32, #tpu.memory_space<vmem>>, vector<1x128xf32>
    %579 = vector.broadcast %578 : vector<1x128xf32> to vector<16x128xf32>
    %580 = arith.mulf %577, %579 : vector<16x128xf32>
    %581 = arith.mulf %580, %580 : vector<16x128xf32>
    %cst_207 = arith.constant 1.000000e+00 : f32
    %582 = vector.broadcast %cst_207 : f32 to vector<16x128xf32>
    %583 = arith.subf %581, %582 : vector<16x128xf32>
    %cst_208 = arith.constant -5.000000e-01 : f32
    %584 = vector.broadcast %cst_208 : f32 to vector<16x128xf32>
    %585 = arith.mulf %584, %581 : vector<16x128xf32>
    %586 = math.exp %585 : vector<16x128xf32>
    %587 = arith.mulf %583, %586 : vector<16x128xf32>
    %c46 = arith.constant 46 : index
    %c0_209 = arith.constant 0 : index
    %588 = vector.load %arg5[%c46, %c0_209] : memref<49x128xf32, #tpu.memory_space<vmem>>, vector<1x128xf32>
    %589 = vector.broadcast %588 : vector<1x128xf32> to vector<16x128xf32>
    %590 = arith.mulf %587, %589 : vector<16x128xf32>
    %591 = arith.addf %554, %590 : vector<16x128xf32>
    %c30_210 = arith.constant 30 : index
    %c0_211 = arith.constant 0 : index
    %592 = vector.load %arg6[%c30_210, %c0_211] : memref<49x128xf32, #tpu.memory_space<vmem>>, vector<1x128xf32>
    %593 = vector.broadcast %592 : vector<1x128xf32> to vector<16x128xf32>
    %594 = arith.subf %574, %593 : vector<16x128xf32>
    %c14_212 = arith.constant 14 : index
    %c0_213 = arith.constant 0 : index
    %595 = vector.load %arg6[%c14_212, %c0_213] : memref<49x128xf32, #tpu.memory_space<vmem>>, vector<1x128xf32>
    %596 = vector.broadcast %595 : vector<1x128xf32> to vector<16x128xf32>
    %597 = arith.mulf %594, %596 : vector<16x128xf32>
    %598 = arith.mulf %597, %597 : vector<16x128xf32>
    %cst_214 = arith.constant 1.000000e+00 : f32
    %599 = vector.broadcast %cst_214 : f32 to vector<16x128xf32>
    %600 = arith.subf %598, %599 : vector<16x128xf32>
    %cst_215 = arith.constant -5.000000e-01 : f32
    %601 = vector.broadcast %cst_215 : f32 to vector<16x128xf32>
    %602 = arith.mulf %601, %598 : vector<16x128xf32>
    %603 = math.exp %602 : vector<16x128xf32>
    %604 = arith.mulf %600, %603 : vector<16x128xf32>
    %c46_216 = arith.constant 46 : index
    %c0_217 = arith.constant 0 : index
    %605 = vector.load %arg6[%c46_216, %c0_217] : memref<49x128xf32, #tpu.memory_space<vmem>>, vector<1x128xf32>
    %606 = vector.broadcast %605 : vector<1x128xf32> to vector<16x128xf32>
    %607 = arith.mulf %604, %606 : vector<16x128xf32>
    %608 = arith.addf %571, %607 : vector<16x128xf32>
    %609 = vector.extract_strided_slice %25 {offsets = [0, 15], sizes = [16, 1], strides = [1, 1]} : vector<16x16xf32> to vector<16x1xf32>
    %610 = vector.shape_cast %609 : vector<16x1xf32> to vector<16x1xf32>
    %611 = vector.broadcast %610 : vector<16x1xf32> to vector<16x128xf32>
    %c31 = arith.constant 31 : index
    %c0_218 = arith.constant 0 : index
    %612 = vector.load %arg5[%c31, %c0_218] : memref<49x128xf32, #tpu.memory_space<vmem>>, vector<1x128xf32>
    %613 = vector.broadcast %612 : vector<1x128xf32> to vector<16x128xf32>
    %614 = arith.subf %611, %613 : vector<16x128xf32>
    %c15 = arith.constant 15 : index
    %c0_219 = arith.constant 0 : index
    %615 = vector.load %arg5[%c15, %c0_219] : memref<49x128xf32, #tpu.memory_space<vmem>>, vector<1x128xf32>
    %616 = vector.broadcast %615 : vector<1x128xf32> to vector<16x128xf32>
    %617 = arith.mulf %614, %616 : vector<16x128xf32>
    %618 = arith.mulf %617, %617 : vector<16x128xf32>
    %cst_220 = arith.constant 1.000000e+00 : f32
    %619 = vector.broadcast %cst_220 : f32 to vector<16x128xf32>
    %620 = arith.subf %618, %619 : vector<16x128xf32>
    %cst_221 = arith.constant -5.000000e-01 : f32
    %621 = vector.broadcast %cst_221 : f32 to vector<16x128xf32>
    %622 = arith.mulf %621, %618 : vector<16x128xf32>
    %623 = math.exp %622 : vector<16x128xf32>
    %624 = arith.mulf %620, %623 : vector<16x128xf32>
    %c47 = arith.constant 47 : index
    %c0_222 = arith.constant 0 : index
    %625 = vector.load %arg5[%c47, %c0_222] : memref<49x128xf32, #tpu.memory_space<vmem>>, vector<1x128xf32>
    %626 = vector.broadcast %625 : vector<1x128xf32> to vector<16x128xf32>
    %627 = arith.mulf %624, %626 : vector<16x128xf32>
    %628 = arith.addf %591, %627 : vector<16x128xf32>
    %c31_223 = arith.constant 31 : index
    %c0_224 = arith.constant 0 : index
    %629 = vector.load %arg6[%c31_223, %c0_224] : memref<49x128xf32, #tpu.memory_space<vmem>>, vector<1x128xf32>
    %630 = vector.broadcast %629 : vector<1x128xf32> to vector<16x128xf32>
    %631 = arith.subf %611, %630 : vector<16x128xf32>
    %c15_225 = arith.constant 15 : index
    %c0_226 = arith.constant 0 : index
    %632 = vector.load %arg6[%c15_225, %c0_226] : memref<49x128xf32, #tpu.memory_space<vmem>>, vector<1x128xf32>
    %633 = vector.broadcast %632 : vector<1x128xf32> to vector<16x128xf32>
    %634 = arith.mulf %631, %633 : vector<16x128xf32>
    %635 = arith.mulf %634, %634 : vector<16x128xf32>
    %cst_227 = arith.constant 1.000000e+00 : f32
    %636 = vector.broadcast %cst_227 : f32 to vector<16x128xf32>
    %637 = arith.subf %635, %636 : vector<16x128xf32>
    %cst_228 = arith.constant -5.000000e-01 : f32
    %638 = vector.broadcast %cst_228 : f32 to vector<16x128xf32>
    %639 = arith.mulf %638, %635 : vector<16x128xf32>
    %640 = math.exp %639 : vector<16x128xf32>
    %641 = arith.mulf %637, %640 : vector<16x128xf32>
    %c47_229 = arith.constant 47 : index
    %c0_230 = arith.constant 0 : index
    %642 = vector.load %arg6[%c47_229, %c0_230] : memref<49x128xf32, #tpu.memory_space<vmem>>, vector<1x128xf32>
    %643 = vector.broadcast %642 : vector<1x128xf32> to vector<16x128xf32>
    %644 = arith.mulf %641, %643 : vector<16x128xf32>
    %645 = arith.addf %608, %644 : vector<16x128xf32>
    %646 = arith.mulf %3, %20 : vector<16x1xf32>
    %647 = arith.mulf %2, %646 : vector<16x1xf32>
    %648 = arith.subf %7, %647 : vector<16x1xf32>
    %649 = vector.extract_strided_slice %32 {offsets = [0, 0], sizes = [16, 128], strides = [1, 1]} : vector<16x256xf32> to vector<16x128xf32>
    %650 = vector.broadcast %44 : vector<16x1xf32> to vector<16x128xf32>
    %651 = arith.mulf %650, %649 : vector<16x128xf32>
    %652 = vector.extract_strided_slice %32 {offsets = [0, 128], sizes = [16, 128], strides = [1, 1]} : vector<16x256xf32> to vector<16x128xf32>
    %653 = vector.broadcast %45 : vector<16x1xf32> to vector<16x128xf32>
    %654 = arith.mulf %653, %652 : vector<16x128xf32>
    %655 = arith.addf %651, %654 : vector<16x128xf32>
    %656 = vector.broadcast %46 : vector<16x1xf32> to vector<16x128xf32>
    %657 = arith.mulf %656, %628 : vector<16x128xf32>
    %658 = arith.addf %655, %657 : vector<16x128xf32>
    %659 = vector.broadcast %47 : vector<16x1xf32> to vector<16x128xf32>
    %660 = arith.mulf %659, %645 : vector<16x128xf32>
    %661 = arith.addf %658, %660 : vector<16x128xf32>
    %662 = vector.broadcast %646 : vector<16x1xf32> to vector<16x128xf32>
    %663 = arith.mulf %661, %662 : vector<16x128xf32>
    %664 = vector.broadcast %648 : vector<16x1xf32> to vector<16x128xf32>
    %665 = arith.addf %663, %664 : vector<16x128xf32>
    %c0_231 = arith.constant 0 : index
    %c0_232 = arith.constant 0 : index
    %666 = vector.load %arg7[%c0_231, %c0_232] : memref<16x128xf32, #tpu.memory_space<vmem>>, vector<16x128xf32>
    tpu.vector_store %arg7[%c0_231, %c0_232], %665 {strides = array<i32>} : memref<16x128xf32, #tpu.memory_space<vmem>>, vector<16x128xf32>,
    return
  }
  func.func @transform_0(%arg0: i32) -> (i32, i32) {
    %c0_i32 = arith.constant 0 : i32
    %c0_i32_0 = arith.constant 0 : i32
    return %arg0, %c0_i32 : i32, i32
  }
  func.func @transform_1(%arg0: i32) -> (i32, i32) {
    %c0_i32 = arith.constant 0 : i32
    %c0_i32_0 = arith.constant 0 : i32
    return %arg0, %c0_i32 : i32, i32
  }
  func.func @transform_2(%arg0: i32) -> (i32, i32) {
    %c0_i32 = arith.constant 0 : i32
    %c0_i32_0 = arith.constant 0 : i32
    %c0_i32_1 = arith.constant 0 : i32
    return %c0_i32, %c0_i32_0 : i32, i32
  }
  func.func @transform_3(%arg0: i32) -> (i32, i32) {
    %c0_i32 = arith.constant 0 : i32
    %c0_i32_0 = arith.constant 0 : i32
    %c0_i32_1 = arith.constant 0 : i32
    return %c0_i32, %c0_i32_0 : i32, i32
  }
  func.func @transform_4(%arg0: i32) -> (i32, i32) {
    %c0_i32 = arith.constant 0 : i32
    %c0_i32_0 = arith.constant 0 : i32
    %c0_i32_1 = arith.constant 0 : i32
    return %c0_i32, %c0_i32_0 : i32, i32
  }
  func.func @transform_5(%arg0: i32) -> (i32, i32) {
    %c0_i32 = arith.constant 0 : i32
    %c0_i32_0 = arith.constant 0 : i32
    %c0_i32_1 = arith.constant 0 : i32
    return %c0_i32, %c0_i32_0 : i32, i32
  }
  func.func @transform_6(%arg0: i32) -> (i32, i32) {
    %c0_i32 = arith.constant 0 : i32
    %c0_i32_0 = arith.constant 0 : i32
    return %arg0, %c0_i32 : i32, i32
  }
}

</mosaic_0001>

<llo_original>
// kernel: tpu_custom_call.1
$region0: #{tpu_custom_call.1}
  #allocation0 [shape = 'u32[]', space=smem, size = 0x4, offset = 0x4, fixed_abs, tag = 'smem constant byte address 0x4 - core index']
  #allocation1 [shape = 'u32[144,128]{1,0:T(1,128)}', space=vmem, size = 0x12000, scoped, tag = 'internal scratch']
  %s0 = inlined_call_operand.vmem [shape: f32[32,16], index: 0, kind: input, shape index: {}]
  %s1 = inlined_call_operand.vmem [shape: f32[32,3], index: 1, kind: input, shape index: {}]
  %s2 = inlined_call_operand.vmem [shape: f32[32,256], index: 2, kind: input, shape index: {}]
  %s3 = inlined_call_operand.vmem [shape: f32[1,256], index: 3, kind: input, shape index: {}]
  %s4 = inlined_call_operand.hbm [shape: f32[49,128], index: 4, kind: input, shape index: {}]
  %s5 = inlined_call_operand.hbm [shape: f32[49,128], index: 5, kind: input, shape index: {}]
  %s6 = inlined_call_operand.hbm [shape: f32[32,128], index: 6, kind: output, shape index: {}]
  %s7 = sld [smem:[#allocation0]]
  $region65: #{tpu_custom_call.1} parent=0
    _
  %s9 = ssub.s32 1, %s7
  %s10 = scalar_select 0, %s9, %s7
  $region1: #{tpu_custom_call.1} parent=0
    #allocation2 [shape = 'u8[28672]{0}', space=vmem, size = 0x7000, scoped, tag = 'input window, operand 4, single buffered']
    #allocation3 [shape = 's32[2]{0}', space=sflag, size = 0x8, scoped, tag = 'scoped memory for tpu_custom_call.1']
    #allocation4 [shape = 's32[2]{0}', space=sflag, size = 0x8, scoped, tag = 'scoped memory for tpu_custom_call.1']
    #allocation5 [shape = 'u8[28672]{0}', space=vmem, size = 0x7000, scoped, tag = 'input window, operand 5, single buffered']
    #allocation6 [shape = 's32[1]{0}', space=sflag, size = 0x4, scoped, tag = 'scoped memory for tpu_custom_call.1']
    #allocation7 [shape = 'u8[16384]{0}', space=vmem, size = 0x4000, scoped, tag = 'output window, operand 0']
    %11 = vsyncpa [#allocation3], 0
    %12 = vsyncpa [#allocation6], 0
    %13 = vsyncpa [#allocation4], 0
    %s14 = scalar_lea.sflag [#allocation4], 1
    %15 = vsyncpa %s14, 0
    loop: start=0, step=1, limit=4
    $region2: #{tpu_custom_call.1} parent=1 // loop_pre_header
      _
    $region3: #{tpu_custom_call.1} parent=1 // loop_header
      %s17 = sphi 0, %s21
      %p18 = scmp.ge.s32.totalorder %s17, 4
      %s27 = sphi 0, %s29
      %s30 = sphi 0, %s27
      %s31 = sphi 0, %s30
      %s47 = sphi 0, %s31
      %s53 = sphi 0, %s55
      %s56 = sphi 0, %s53
      %s57 = sphi 0, %s56
      %s73 = sphi 0, %s57
      %s77 = sphi 0, %s77
      %s79 = sphi 0, %s77
      %s80 = sphi 0, %s79
      %s94 = sphi 0, %s80
      %s98 = sphi 0, %s98
      %s100 = sphi 0, %s98
      %s101 = sphi 0, %s100
      %s115 = sphi 0, %s101
      %s119 = sphi 0, %s119
      %s121 = sphi 0, %s119
      %s122 = sphi 0, %s121
      %s136 = sphi 0, %s122
      %s140 = sphi 0, %s140
      %s142 = sphi 0, %s140
      %s143 = sphi 0, %s142
      %s157 = sphi 0, %s143
      %s163 = sphi 0, %s165
      %s166 = sphi 0, %s163
      %s167 = sphi 0, %s166
      %s183 = sphi 0, %s167
    $region4: #{tpu_custom_call.1} parent=1 // loop_header_branch
      %20 = sbr.rel (%p18) target = $region8
    $region5: #{tpu_custom_call.1} parent=1 // loop_body
      %s22 = ssub.s32 %s17, 1
      %s23 = ssub.s32 %s17, 2
      %s24 = sadd.s32 %s17, 1
      %s25 = ssub.s32 %s17, %s24
      %p26 = scmp.eq.s32.totalorder %s25, 0
      %s28 = sadd.s32 %s27, 1
      %s29 = scalar_select %p26, %s27, %s28
      %p32 = pneg %p26
      %p33 = scmp.eq.s32.totalorder %s17, 1
      %p34 = por %p32, %p33
      %p35 = scmp.ne.s32.totalorder %s27, %s30
      %p36 = scmp.eq.s32.totalorder %s17, 0
      %p37 = por %p35, %p36
      %p38 = scmp.ne.s32.totalorder %s27, %s30
      %p39 = scmp.eq.s32.totalorder %s22, 1
      %p40 = por %p38, %p39
      %p41 = scmp.ne.s32.totalorder %s30, %s31
      %p42 = scmp.eq.s32.totalorder %s22, 0
      %p43 = por %p41, %p42
      %p44 = scmp.ne.s32.totalorder %s30, %s31
      %p45 = scmp.eq.s32.totalorder %s23, 1
      %p46 = por %p44, %p45
      %p48 = scmp.ne.s32.totalorder %s31, %s47
      %p49 = scmp.eq.s32.totalorder %s23, 0
      %p50 = por %p48, %p49
      %s51 = ssub.s32 %s17, %s24
      %p52 = scmp.eq.s32.totalorder %s51, 0
      %s54 = sadd.s32 %s53, 1
      %s55 = scalar_select %p52, %s53, %s54
      %p58 = pneg %p52
      %p59 = scmp.eq.s32.totalorder %s17, 1
      %p60 = por %p58, %p59
      %p61 = scmp.ne.s32.totalorder %s53, %s56
      %p62 = scmp.eq.s32.totalorder %s17, 0
      %p63 = por %p61, %p62
      %p64 = scmp.ne.s32.totalorder %s53, %s56
      %p65 = scmp.eq.s32.totalorder %s22, 1
      %p66 = por %p64, %p65
      %p67 = scmp.ne.s32.totalorder %s56, %s57
      %p68 = scmp.eq.s32.totalorder %s22, 0
      %p69 = por %p67, %p68
      %p70 = scmp.ne.s32.totalorder %s56, %s57
      %p71 = scmp.eq.s32.totalorder %s23, 1
      %p72 = por %p70, %p71
      %p74 = scmp.ne.s32.totalorder %s57, %s73
      %p75 = scmp.eq.s32.totalorder %s23, 0
      %p76 = por %p74, %p75
      %s78 = sadd.s32 %s77, 1
      %p81 = scmp.eq.s32.totalorder %s17, 1
      %p82 = scmp.ne.s32.totalorder %s77, %s79
      %p83 = scmp.eq.s32.totalorder %s17, 0
      %p84 = por %p82, %p83
      %p85 = scmp.ne.s32.totalorder %s77, %s79
      %p86 = scmp.eq.s32.totalorder %s22, 1
      %p87 = por %p85, %p86
      %p88 = scmp.ne.s32.totalorder %s79, %s80
      %p89 = scmp.eq.s32.totalorder %s22, 0
      %p90 = por %p88, %p89
      %p91 = scmp.ne.s32.totalorder %s79, %s80
      %p92 = scmp.eq.s32.totalorder %s23, 1
      %p93 = por %p91, %p92
      %p95 = scmp.ne.s32.totalorder %s80, %s94
      %p96 = scmp.eq.s32.totalorder %s23, 0
      %p97 = por %p95, %p96
      %s99 = sadd.s32 %s98, 1
      %p102 = scmp.eq.s32.totalorder %s17, 1
      %p103 = scmp.ne.s32.totalorder %s98, %s100
      %p104 = scmp.eq.s32.totalorder %s17, 0
      %p105 = por %p103, %p104
      %p106 = scmp.ne.s32.totalorder %s98, %s100
      %p107 = scmp.eq.s32.totalorder %s22, 1
      %p108 = por %p106, %p107
      %p109 = scmp.ne.s32.totalorder %s100, %s101
      %p110 = scmp.eq.s32.totalorder %s22, 0
      %p111 = por %p109, %p110
      %p112 = scmp.ne.s32.totalorder %s100, %s101
      %p113 = scmp.eq.s32.totalorder %s23, 1
      %p114 = por %p112, %p113
      %p116 = scmp.ne.s32.totalorder %s101, %s115
      %p117 = scmp.eq.s32.totalorder %s23, 0
      %p118 = por %p116, %p117
      %s120 = sadd.s32 %s119, 1
      %p123 = scmp.eq.s32.totalorder %s17, 1
      %p124 = scmp.ne.s32.totalorder %s119, %s121
      %p125 = scmp.eq.s32.totalorder %s17, 0
      %p126 = por %p124, %p125
      %p127 = scmp.ne.s32.totalorder %s119, %s121
      %p128 = scmp.eq.s32.totalorder %s22, 1
      %p129 = por %p127, %p128
      %p130 = scmp.ne.s32.totalorder %s121, %s122
      %p131 = scmp.eq.s32.totalorder %s22, 0
      %p132 = por %p130, %p131
      %p133 = scmp.ne.s32.totalorder %s121, %s122
      %p134 = scmp.eq.s32.totalorder %s23, 1
      %p135 = por %p133, %p134
      %p137 = scmp.ne.s32.totalorder %s122, %s136
      %p138 = scmp.eq.s32.totalorder %s23, 0
      %p139 = por %p137, %p138
      %s141 = sadd.s32 %s140, 1
      %p144 = scmp.eq.s32.totalorder %s17, 1
      %p145 = scmp.ne.s32.totalorder %s140, %s142
      %p146 = scmp.eq.s32.totalorder %s17, 0
      %p147 = por %p145, %p146
      %p148 = scmp.ne.s32.totalorder %s140, %s142
      %p149 = scmp.eq.s32.totalorder %s22, 1
      %p150 = por %p148, %p149
      %p151 = scmp.ne.s32.totalorder %s142, %s143
      %p152 = scmp.eq.s32.totalorder %s22, 0
      %p153 = por %p151, %p152
      %p154 = scmp.ne.s32.totalorder %s142, %s143
      %p155 = scmp.eq.s32.totalorder %s23, 1
      %p156 = por %p154, %p155
      %p158 = scmp.ne.s32.totalorder %s143, %s157
      %p159 = scmp.eq.s32.totalorder %s23, 0
      %p160 = por %p158, %p159
      %s161 = ssub.s32 %s17, %s24
      %p162 = scmp.eq.s32.totalorder %s161, 0
      %s164 = sadd.s32 %s163, 1
      %s165 = scalar_select %p162, %s163, %s164
      %p168 = pneg %p162
      %p169 = scmp.eq.s32.totalorder %s17, 1
      %p170 = por %p168, %p169
      %p171 = scmp.ne.s32.totalorder %s163, %s166
      %p172 = scmp.eq.s32.totalorder %s17, 0
      %p173 = por %p171, %p172
      %p174 = scmp.ne.s32.totalorder %s163, %s166
      %p175 = scmp.eq.s32.totalorder %s22, 1
      %p176 = por %p174, %p175
      %p177 = scmp.ne.s32.totalorder %s166, %s167
      %p178 = scmp.eq.s32.totalorder %s22, 0
      %p179 = por %p177, %p178
      %p180 = scmp.ne.s32.totalorder %s166, %s167
      %p181 = scmp.eq.s32.totalorder %s23, 1
      %p182 = por %p180, %p181
      %p184 = scmp.ne.s32.totalorder %s167, %s183
      %p185 = scmp.eq.s32.totalorder %s23, 0
      %p186 = por %p184, %p185
      %p187 = scmp.le.s32.totalorder 1, %s17
      %p188 = scmp.lt.s32.totalorder %s17, 3
      %p189 = pnand %p187, %p188
      %p190 = pneg %p189
      // Predicated region
      $region9: #{tpu_custom_call.1} parent=5 // pred_check
        _
      $region10: #{tpu_custom_call.1} parent=5 // pred_check_branch
        %192 = sbr.rel (%p189) target = $region12
      $region11: #{tpu_custom_call.1} parent=5 // pred_region
        %s193 = ssub.s32 %s17, 1
        // Predicated region
        $region13: #{tpu_custom_call.1} parent=11 // pred_check
          %p194 = pneg %p90
        $region14: #{tpu_custom_call.1} parent=11 // pred_check_branch
          %196 = sbr.rel (%p194) target = $region16
        $region15: #{tpu_custom_call.1} parent=11 // pred_region
          _
        $region16: #{tpu_custom_call.1} parent=11 // pred_fallthru
          _
        // Predicated region
        $region17: #{tpu_custom_call.1} parent=11 // pred_check
          %p197 = pneg %p111
        $region18: #{tpu_custom_call.1} parent=11 // pred_check_branch
          %199 = sbr.rel (%p197) target = $region20
        $region19: #{tpu_custom_call.1} parent=11 // pred_region
          _
        $region20: #{tpu_custom_call.1} parent=11 // pred_fallthru
          _
        // Predicated region
        $region21: #{tpu_custom_call.1} parent=11 // pred_check
          %p200 = pneg %p132
        $region22: #{tpu_custom_call.1} parent=11 // pred_check_branch
          %202 = sbr.rel (%p200) target = $region24
        $region23: #{tpu_custom_call.1} parent=11 // pred_region
          %s204 = ssub.s32 896, 896
          %205 = vsyncadd [#allocation3], %s204
          %s206 = sshll.u32 [#allocation2], 4
          %s207 = int_to_ptr.vmem [resolvable:$true] %s206
          %212 = dma.hbm_to_vmem [thread:$0]  %s4, 896, %s207, [#allocation3], 128, 128, 8
        $region24: #{tpu_custom_call.1} parent=11 // pred_fallthru
          _
        // Predicated region
        $region25: #{tpu_custom_call.1} parent=11 // pred_check
          %p213 = pneg %p153
        $region26: #{tpu_custom_call.1} parent=11 // pred_check_branch
          %215 = sbr.rel (%p213) target = $region28
        $region27: #{tpu_custom_call.1} parent=11 // pred_region
          %s217 = ssub.s32 896, 896
          %218 = vsyncadd [#allocation6], %s217
          %s219 = sshll.u32 [#allocation5], 4
          %s220 = int_to_ptr.vmem [resolvable:$true] %s219
          %225 = dma.hbm_to_vmem [thread:$0]  %s5, 896, %s220, [#allocation6], 128, 128, 8
        $region28: #{tpu_custom_call.1} parent=11 // pred_fallthru
          _
      $region12: #{tpu_custom_call.1} parent=5 // pred_fallthru
        _
      %p226 = scmp.lt.s32.totalorder %s17, 2
      // Predicated region
      $region29: #{tpu_custom_call.1} parent=5 // pred_check
        %p227 = pneg %p226
      $region30: #{tpu_custom_call.1} parent=5 // pred_check_branch
        %229 = sbr.rel (%p227) target = $region32
      $region31: #{tpu_custom_call.1} parent=5 // pred_region
        // Predicated region
        $region33: #{tpu_custom_call.1} parent=31 // pred_check
          %p230 = pneg %p37
        $region34: #{tpu_custom_call.1} parent=31 // pred_check_branch
          %232 = sbr.rel (%p230) target = $region36
        $region35: #{tpu_custom_call.1} parent=31 // pred_region
          %s233 = smul.u32 2, %s17
          %p234 = scmp.lt.s32.totalorder %s233, 3
          %s235 = scalar_select %p234, %s233, 3
          %s236 = smul.addr %s235, 8
          %s237 = scalar_lea.vmem %s0, %s236
          %s238 = smul.u32 2, %s17
        $region36: #{tpu_custom_call.1} parent=31 // pred_fallthru
          _
        // Predicated region
        $region37: #{tpu_custom_call.1} parent=31 // pred_check
          %p239 = pneg %p63
        $region38: #{tpu_custom_call.1} parent=31 // pred_check_branch
          %241 = sbr.rel (%p239) target = $region40
        $region39: #{tpu_custom_call.1} parent=31 // pred_region
          %s242 = smul.u32 2, %s17
          %p243 = scmp.lt.s32.totalorder %s242, 3
          %s244 = scalar_select %p243, %s242, 3
          %s245 = smul.addr %s244, 8
          %s246 = scalar_lea.vmem %s1, %s245
          %s247 = smul.u32 2, %s17
        $region40: #{tpu_custom_call.1} parent=31 // pred_fallthru
          _
      $region32: #{tpu_custom_call.1} parent=5 // pred_fallthru
        _
      %p248 = scmp.le.s32.totalorder 1, %s17
      %p249 = scmp.lt.s32.totalorder %s17, 3
      %p250 = pnand %p248, %p249
      %p251 = pneg %p250
      // Predicated region
      $region41: #{tpu_custom_call.1} parent=5 // pred_check
        _
      $region42: #{tpu_custom_call.1} parent=5 // pred_check_branch
        %253 = sbr.rel (%p250) target = $region44
      $region43: #{tpu_custom_call.1} parent=5 // pred_region
        %s254 = ssub.s32 %s17, 1
        // Predicated region
        $region45: #{tpu_custom_call.1} parent=43 // pred_check
          %p255 = pneg %p132
        $region46: #{tpu_custom_call.1} parent=43 // pred_check_branch
          %257 = sbr.rel (%p255) target = $region48
        $region47: #{tpu_custom_call.1} parent=43 // pred_region
          %258 = dma.done [#allocation3], 896
        $region48: #{tpu_custom_call.1} parent=43 // pred_fallthru
          _
        // Predicated region
        $region49: #{tpu_custom_call.1} parent=43 // pred_check
          %p259 = pneg %p153
        $region50: #{tpu_custom_call.1} parent=43 // pred_check_branch
          %261 = sbr.rel (%p259) target = $region52
        $region51: #{tpu_custom_call.1} parent=43 // pred_region
          %262 = dma.done [#allocation6], 896
        $region52: #{tpu_custom_call.1} parent=43 // pred_fallthru
          _
        %s263 = smul.u32 2, %s22
        %p264 = scmp.lt.s32.totalorder %s263, 3
        %s265 = scalar_select %p264, %s263, 3
        %s266 = smul.addr %s265, 8
        %s267 = scalar_lea.vmem %s0, %s266
        %p268 = pneg %p43
        %p269 = pneg %p40
        %s270 = smul.u32 2, %s22
        %p271 = scmp.lt.s32.totalorder %s270, 3
        %s272 = scalar_select %p271, %s270, 3
        %s273 = smul.addr %s272, 8
        %s274 = scalar_lea.vmem %s1, %s273
        %p275 = pneg %p69
        %p276 = pneg %p66
        %p277 = pneg %p90
        %p278 = pneg %p87
        %p279 = pneg %p111
        %p280 = pneg %p108
        %p281 = pneg %p132
        %p282 = pneg %p129
        %p283 = pneg %p153
        %p284 = pneg %p150
        %p285 = pneg %p179
        %p286 = pneg %p176
        %s287 = sand.u32 %s166, 1
        %s288 = scalar_lea.sflag [#allocation4], %s287
        %s289 = sand.u32 %s166, 1
        %s290 = smul.addr %s289, 16
        %s291 = scalar_lea.vmem [#allocation7], %s290
        %s292 = smul.u32 2, %s22
        %p293 = scmp.lt.s32.totalorder %s292, 3
        %s294 = scalar_select %p293, %s292, 3
        %s295 = smul.addr %s294, 8
        %s296 = scalar_lea.vmem %s0, %s295
        %s297 = smul.u32 2, %s22
        %s298 = smul.u32 2, %s22
        %p299 = scmp.lt.s32.totalorder %s298, 3
        %s300 = scalar_select %p299, %s298, 3
        %s301 = smul.addr %s300, 8
        %s302 = scalar_lea.vmem %s1, %s301
        %s303 = smul.u32 2, %s22
        %s304 = smul.u32 2, %s22
        %v305 = vld [vmem:[%s296] sm:$0xff]
        %v306 = vld [vmem:[%s296 + $0x8] sm:$0xff]
        %v307 = vld [vmem:[%s302] sm:$0xff]
        %v308 = vld [vmem:[%s302 + $0x8] sm:$0xff]
        %vm309 = vcmask 130048
        %v310 = vsel %vm309, %v305, 0.0
        %311 = vadd.xlane.f32.xlu0 %v310
        %v312 = vpop.xlane.xlu0 %311
        %v313 = vsel %vm309, %v306, 0.0
        %314 = vadd.xlane.f32.xlu0 %v313
        %v315 = vpop.xlane.xlu0 %314
        %v316 = vrcp.pop 16.0
        %v317 = vmul.f32 %v312, %v316
        %v318 = vmul.f32 %v315, %v316
        %v319 = vsub.f32 %v305, %v317
        %v320 = vsub.f32 %v306, %v318
        %v321 = vmul.f32 %v319, %v319
        %v322 = vmul.f32 %v320, %v320
        %v323 = vsel %vm309, %v321, 0.0
        %324 = vadd.xlane.f32.xlu0 %v323
        %v325 = vpop.xlane.xlu0 %324
        %v326 = vsel %vm309, %v322, 0.0
        %327 = vadd.xlane.f32.xlu0 %v326
        %v328 = vpop.xlane.xlu0 %327
        %v329 = vmul.f32 %v325, %v316
        %v330 = vmul.f32 %v328, %v316
        %v331 = vadd.f32 %v329, 1e-05
        %v332 = vadd.f32 %v330, 1e-05
        %v333 = vrsqrt.pop %v331
        %v334 = vrsqrt.pop %v332
        %v335 = vmul.f32 %v331, %v333
        %v336 = vmul.f32 %v332, %v334
        %v337 = vmul.f32 %v333, %v307
        %v338 = vmul.f32 %v334, %v308
        %340 = vset.pattern.permute.xlu0 0
        %341 = vperm.xlu0 %340, %v337
        %v342 = vpop.permute.xlu0 %341
        %345 = vset.pattern.permute.xlu0 0
        %346 = vperm.xlu0 %345, %v338
        %v347 = vpop.permute.xlu0 %346
        %v349 = vmul.f32 %v319, %v342
        %v350 = vmul.f32 %v320, %v347
        %352 = vset.pattern.permute.xlu0 1
        %353 = vperm.xlu0 %352, %v307
        %v354 = vpop.permute.xlu0 %353
        %357 = vset.pattern.permute.xlu0 1
        %358 = vperm.xlu0 %357, %v308
        %v359 = vpop.permute.xlu0 %358
        %v361 = vadd.f32 %v349, %v354
        %v362 = vadd.f32 %v350, %v359
        %v363 = vmul.f32 %v361, %v361
        %v364 = vmul.f32 %v362, %v362
        %367 = vrot.lane.b32.xlu0 %v363, 16
        %v368 = vpop.permute.xlu0 %367
        %369 = vrot.lane.b32.xlu0 %v364, 16
        %v370 = vpop.permute.xlu0 %369
        %v373 = vsel %vm309, %v361, %v368
        %v374 = vsel %vm309, %v362, %v370
        %v375 = vld [vmem:[%s2] sm:$0xff]
        %v376 = vld [vmem:[%s2 + $0x8] sm:$0xff]
        %v377 = vld [vmem:[%s2 + $0x10] sm:$0xff]
        %v378 = vld [vmem:[%s2 + $0x18] sm:$0xff]
        %v379 = vld [vmem:[%s2 + $0x20] sm:$0xff]
        %v380 = vld [vmem:[%s2 + $0x28] sm:$0xff]
        %v381 = vld [vmem:[%s2 + $0x30] sm:$0xff]
        %v382 = vld [vmem:[%s2 + $0x38] sm:$0xff]
        %v383 = vld [vmem:[%s3] sm:$0x3]
        %v385 = vlaneseq
        %v386 = vshrl.u32 %v385, 7
        %v387 = vsub.s32 0, %v386
        %v388 = vrot.slane %v383, %v387
        %v389 = vlaneseq
        %v390 = vshrl.u32 %v389, 7
        %v391 = vsub.s32 1, %v390
        %v392 = vrot.slane %v383, %v391
        %vm395 = vcmask 261120
        %v397 = vsel %vm395, %v373, 0
        %v400 = vsel %vm395, %v374, 0
        %402 = vmatprep.subr.mxu0 %v376
        %403 = vmatpush1.msra.mxu0 %v375
        %404 = vmatprep.subr.mxu0 %v378
        %405 = vmatpush1.msra.mxu0 %v377
        %406 = vmatprep.subr.mxu0 %v380
        %407 = vmatpush1.msra.mxu0 %v379
        %408 = vmatprep.subr.mxu0 %v382
        %409 = vmatpush1.msra.mxu0 %v381
        %410 = vmatprep.subr.mxu0 0.0
        %411 = vmatpush1.msra.mxu0 0.0
        %412 = vmatprep.subr.mxu0 0.0
        %413 = vmatpush1.msra.mxu0 0.0
        %414 = vmatprep.subr.mxu0 0.0
        %415 = vmatpush1.msra.mxu0 0.0
        %416 = vmatprep.subr.mxu0 0.0
        %417 = vmatpush1.msra.mxu0 0.0
        %418 = vmatprep.subr.mxu0 0.0
        %419 = vmatpush1.msra.mxu0 0.0
        %420 = vmatprep.subr.mxu0 0.0
        %421 = vmatpush1.msra.mxu0 0.0
        %422 = vmatprep.subr.mxu0 0.0
        %423 = vmatpush1.msra.mxu0 0.0
        %424 = vmatprep.subr.mxu0 0.0
        %425 = vmatpush1.msra.mxu0 0.0
        %426 = vmatprep.subr.mxu0 0.0
        %427 = vmatpush1.msra.mxu0 0.0
        %428 = vmatprep.subr.mxu0 0.0
        %429 = vmatpush1.msra.mxu0 0.0
        %430 = vmatprep.subr.mxu0 0.0
        %431 = vmatpush1.msra.mxu0 0.0
        %432 = vmatprep.subr.mxu0 0.0
        %433 = vmatpush1.msra.mxu0 0.0
        %434 = vmatprep.subr.mxu0 0.0
        %435 = vmatpush1.msra.mxu0 0.0
        %436 = vmatprep.subr.mxu0 0.0
        %437 = vmatpush1.msra.mxu0 0.0
        %438 = vmatprep.subr.mxu0 0.0
        %439 = vmatpush1.msra.mxu0 0.0
        %440 = vmatprep.subr.mxu0 0.0
        %441 = vmatpush1.msra.mxu0 0.0
        %442 = vmatprep.subr.mxu0 0.0
        %443 = vmatpush1.msra.mxu0 0.0
        %444 = vmatprep.subr.mxu0 0.0
        %445 = vmatpush1.msra.mxu0 0.0
        %446 = vmatprep.subr.mxu0 0.0
        %447 = vmatpush1.msra.mxu0 0.0
        %448 = vmatprep.subr.mxu0 0.0
        %449 = vmatpush1.msra.mxu0 0.0
        %450 = vmatprep.subr.mxu0 0.0
        %451 = vmatpush1.msra.mxu0 0.0
        %452 = vmatprep.subr.mxu0 0.0
        %453 = vmatpush1.msra.mxu0 0.0
        %454 = vmatprep.subr.mxu0 0.0
        %455 = vmatpush1.msra.mxu0 0.0
        %456 = vmatprep.subr.mxu0 0.0
        %457 = vmatpush1.msra.mxu0 0.0
        %458 = vmatprep.subr.mxu0 0.0
        %459 = vmatpush1.msra.mxu0 0.0
        %460 = vmatprep.subr.mxu0 0.0
        %461 = vmatpush1.msra.mxu0 0.0
        %462 = vmatprep.subr.mxu0 0.0
        %463 = vmatpush1.msra.mxu0 0.0
        %464 = vmatprep.subr.mxu0 0.0
        %465 = vmatpush1.msra.mxu0 0.0
        %466 = vmatprep.mubr.f32.mxu0 0.0
        %467 = vmatmul.mubr.f32.gmra.mrb[0].mxu0 %v397
        %v468 = vpop.f32.mrb[0].mxu0
        %v469 = vadd.f32 %v388, %v468
        %v470 = vpop.f32.mrb[0].mxu0
        %v471 = vadd.f32 %v392, %v470
        %472 = vmatprep.mubr.f32.mxu0 0.0
        %473 = vmatmul.mubr.f32.gmra.mrb[0].mxu0 %v400
        %v474 = vpop.f32.mrb[0].mxu0
        %v475 = vadd.f32 %v388, %v474
        %v476 = vpop.f32.mrb[0].mxu0
        %v477 = vadd.f32 %v392, %v476
        %478 = vdwg.mxu0
        %vm479 = vcmask 130144
        %v480 = vsel %vm479, %v469, -inf
        %481 = vmax.xlane.f32.xlu0 %v480
        %v482 = vpop.xlane.xlu0 %481
        %v483 = vsel %vm479, %v475, -inf
        %484 = vmax.xlane.f32.xlu0 %v483
        %v485 = vpop.xlane.xlu0 %484
        %v486 = vsub.f32 %v469, %v482
        %v487 = vsub.f32 %v475, %v485
        %v488 = vmul.f32 %v486, 1.442695
        %v489 = vpow.pop %v488
        %v490 = vmul.f32 %v487, 1.442695
        %v491 = vpow.pop %v490
        %494 = vrot.lane.b32.xlu0 %v489, 116
        %v495 = vpop.permute.xlu0 %494
        %496 = vrot.lane.b32.xlu0 %v491, 116
        %v497 = vpop.permute.xlu0 %496
        %vm500 = vcmask 31744
        %v501 = vsel %vm500, %v495, 0.0
        %502 = vadd.xlane.f32.xlu0 %v501
        %v503 = vpop.xlane.xlu0 %502
        %v504 = vsel %vm500, %v497, 0.0
        %505 = vadd.xlane.f32.xlu0 %v504
        %v506 = vpop.xlane.xlu0 %505
        %v507 = vrcp.pop %v503
        %v508 = vrcp.pop %v506
        %v509 = vmul.f32 %v489, %v507
        %v510 = vmul.f32 %v491, %v508
        %v511 = vld [vmem:[#allocation2 + $0x30] sm:$0x1]
        %v512 = vlaneseq
        %v513 = vshrl.u32 %v512, 7
        %v514 = vsub.s32 0, %v513
        %v515 = vrot.slane %v511, %v514
        %v516 = vld [vmem:[#allocation5 + $0x30] sm:$0x1]
        %v517 = vlaneseq
        %v518 = vshrl.u32 %v517, 7
        %v519 = vsub.s32 0, %v518
        %v520 = vrot.slane %v516, %v519
        %522 = vset.pattern.permute.xlu0 0
        %523 = vperm.xlu0 %522, %v361
        %v524 = vpop.permute.xlu0 %523
        %527 = vset.pattern.permute.xlu0 0
        %528 = vperm.xlu0 %527, %v362
        %v529 = vpop.permute.xlu0 %528
        %v531 = vld [vmem:[#allocation2 + $0x10] sm:$0x1]
        %v532 = vlaneseq
        %v533 = vshrl.u32 %v532, 7
        %v534 = vsub.s32 0, %v533
        %v535 = vrot.slane %v531, %v534
        %v536 = vsub.f32 %v524, %v535
        %v537 = vsub.f32 %v529, %v535
        %v538 = vld [vmem:[#allocation2] sm:$0x1]
        %v539 = vlaneseq
        %v540 = vshrl.u32 %v539, 7
        %v541 = vsub.s32 0, %v540
        %v542 = vrot.slane %v538, %v541
        %v543 = vmul.f32 %v536, %v542
        %v544 = vmul.f32 %v537, %v542
        %v545 = vmul.f32 %v543, %v543
        %v546 = vmul.f32 %v544, %v544
        %v547 = vsub.f32 %v545, 1.0
        %v548 = vsub.f32 %v546, 1.0
        %v549 = vmul.f32 %v545, -0.5
        %v550 = vmul.f32 %v546, -0.5
        %v551 = vmul.f32 %v549, 1.442695
        %v552 = vpow.pop %v551
        %v553 = vmul.f32 %v550, 1.442695
        %v554 = vpow.pop %v553
        %v555 = vmul.f32 %v547, %v552
        %v556 = vmul.f32 %v548, %v554
        %v557 = vld [vmem:[#allocation2 + $0x20] sm:$0x1]
        %v558 = vlaneseq
        %v559 = vshrl.u32 %v558, 7
        %v560 = vsub.s32 0, %v559
        %v561 = vrot.slane %v557, %v560
        %v562 = vmul.f32 %v555, %v561
        %v563 = vmul.f32 %v556, %v561
        %v564 = vadd.f32 %v515, %v562
        %v565 = vadd.f32 %v515, %v563
        %v566 = vld [vmem:[#allocation5 + $0x10] sm:$0x1]
        %v567 = vlaneseq
        %v568 = vshrl.u32 %v567, 7
        %v569 = vsub.s32 0, %v568
        %v570 = vrot.slane %v566, %v569
        %v571 = vsub.f32 %v524, %v570
        %v572 = vsub.f32 %v529, %v570
        %v573 = vld [vmem:[#allocation5] sm:$0x1]
        %v574 = vlaneseq
        %v575 = vshrl.u32 %v574, 7
        %v576 = vsub.s32 0, %v575
        %v577 = vrot.slane %v573, %v576
        %v578 = vmul.f32 %v571, %v577
        %v579 = vmul.f32 %v572, %v577
        %v580 = vmul.f32 %v578, %v578
        %v581 = vmul.f32 %v579, %v579
        %v582 = vsub.f32 %v580, 1.0
        %v583 = vsub.f32 %v581, 1.0
        %v584 = vmul.f32 %v580, -0.5
        %v585 = vmul.f32 %v581, -0.5
        %v586 = vmul.f32 %v584, 1.442695
        %v587 = vpow.pop %v586
        %v588 = vmul.f32 %v585, 1.442695
        %v589 = vpow.pop %v588
        %v590 = vmul.f32 %v582, %v587
        %v591 = vmul.f32 %v583, %v589
        %v592 = vld [vmem:[#allocation5 + $0x20] sm:$0x1]
        %v593 = vlaneseq
        %v594 = vshrl.u32 %v593, 7
        %v595 = vsub.s32 0, %v594
        %v596 = vrot.slane %v592, %v595
        %v597 = vmul.f32 %v590, %v596
        %v598 = vmul.f32 %v591, %v596
        %v599 = vadd.f32 %v520, %v597
        %v600 = vadd.f32 %v520, %v598
        %601 = vset.pattern.permute.xlu0 1
        %602 = vperm.xlu0 %601, %v361
        %v603 = vpop.permute.xlu0 %602
        %605 = vset.pattern.permute.xlu0 1
        %606 = vperm.xlu0 %605, %v362
        %v607 = vpop.permute.xlu0 %606
        %v609 = vld [vmem:[#allocation2 + $0x11] sm:$0x1]
        %v610 = vlaneseq
        %v611 = vshrl.u32 %v610, 7
        %v612 = vsub.s32 0, %v611
        %v613 = vrot.slane %v609, %v612
        %v614 = vsub.f32 %v603, %v613
        %v615 = vsub.f32 %v607, %v613
        %v616 = vld [vmem:[#allocation2 + $0x1] sm:$0x1]
        %v617 = vlaneseq
        %v618 = vshrl.u32 %v617, 7
        %v619 = vsub.s32 0, %v618
        %v620 = vrot.slane %v616, %v619
        %v621 = vmul.f32 %v614, %v620
        %v622 = vmul.f32 %v615, %v620
        %v623 = vmul.f32 %v621, %v621
        %v624 = vmul.f32 %v622, %v622
        %v625 = vsub.f32 %v623, 1.0
        %v626 = vsub.f32 %v624, 1.0
        %v627 = vmul.f32 %v623, -0.5
        %v628 = vmul.f32 %v624, -0.5
        %v629 = vmul.f32 %v627, 1.442695
        %v630 = vpow.pop %v629
        %v631 = vmul.f32 %v628, 1.442695
        %v632 = vpow.pop %v631
        %v633 = vmul.f32 %v625, %v630
        %v634 = vmul.f32 %v626, %v632
        %v635 = vld [vmem:[#allocation2 + $0x21] sm:$0x1]
        %v636 = vlaneseq
        %v637 = vshrl.u32 %v636, 7
        %v638 = vsub.s32 0, %v637
        %v639 = vrot.slane %v635, %v638
        %v640 = vmul.f32 %v633, %v639
        %v641 = vmul.f32 %v634, %v639
        %v642 = vadd.f32 %v564, %v640
        %v643 = vadd.f32 %v565, %v641
        %v644 = vld [vmem:[#allocation5 + $0x11] sm:$0x1]
        %v645 = vlaneseq
        %v646 = vshrl.u32 %v645, 7
        %v647 = vsub.s32 0, %v646
        %v648 = vrot.slane %v644, %v647
        %v649 = vsub.f32 %v603, %v648
        %v650 = vsub.f32 %v607, %v648
        %v651 = vld [vmem:[#allocation5 + $0x1] sm:$0x1]
        %v652 = vlaneseq
        %v653 = vshrl.u32 %v652, 7
        %v654 = vsub.s32 0, %v653
        %v655 = vrot.slane %v651, %v654
        %v656 = vmul.f32 %v649, %v655
        %v657 = vmul.f32 %v650, %v655
        %v658 = vmul.f32 %v656, %v656
        %v659 = vmul.f32 %v657, %v657
        %v660 = vsub.f32 %v658, 1.0
        %v661 = vsub.f32 %v659, 1.0
        %v662 = vmul.f32 %v658, -0.5
        %v663 = vmul.f32 %v659, -0.5
        %v664 = vmul.f32 %v662, 1.442695
        %v665 = vpow.pop %v664
        %v666 = vmul.f32 %v663, 1.442695
        %v667 = vpow.pop %v666
        %v668 = vmul.f32 %v660, %v665
        %v669 = vmul.f32 %v661, %v667
        %v670 = vld [vmem:[#allocation5 + $0x21] sm:$0x1]
        %v671 = vlaneseq
        %v672 = vshrl.u32 %v671, 7
        %v673 = vsub.s32 0, %v672
        %v674 = vrot.slane %v670, %v673
        %v675 = vmul.f32 %v668, %v674
        %v676 = vmul.f32 %v669, %v674
        %v677 = vadd.f32 %v599, %v675
        %v678 = vadd.f32 %v600, %v676
        %679 = vset.pattern.permute.xlu0 2
        %680 = vperm.xlu0 %679, %v361
        %v681 = vpop.permute.xlu0 %680
        %683 = vset.pattern.permute.xlu0 2
        %684 = vperm.xlu0 %683, %v362
        %v685 = vpop.permute.xlu0 %684
        %v687 = vld [vmem:[#allocation2 + $0x12] sm:$0x1]
        %v688 = vlaneseq
        %v689 = vshrl.u32 %v688, 7
        %v690 = vsub.s32 0, %v689
        %v691 = vrot.slane %v687, %v690
        %v692 = vsub.f32 %v681, %v691
        %v693 = vsub.f32 %v685, %v691
        %v694 = vld [vmem:[#allocation2 + $0x2] sm:$0x1]
        %v695 = vlaneseq
        %v696 = vshrl.u32 %v695, 7
        %v697 = vsub.s32 0, %v696
        %v698 = vrot.slane %v694, %v697
        %v699 = vmul.f32 %v692, %v698
        %v700 = vmul.f32 %v693, %v698
        %v701 = vmul.f32 %v699, %v699
        %v702 = vmul.f32 %v700, %v700
        %v703 = vsub.f32 %v701, 1.0
        %v704 = vsub.f32 %v702, 1.0
        %v705 = vmul.f32 %v701, -0.5
        %v706 = vmul.f32 %v702, -0.5
        %v707 = vmul.f32 %v705, 1.442695
        %v708 = vpow.pop %v707
        %v709 = vmul.f32 %v706, 1.442695
        %v710 = vpow.pop %v709
        %v711 = vmul.f32 %v703, %v708
        %v712 = vmul.f32 %v704, %v710
        %v713 = vld [vmem:[#allocation2 + $0x22] sm:$0x1]
        %v714 = vlaneseq
        %v715 = vshrl.u32 %v714, 7
        %v716 = vsub.s32 0, %v715
        %v717 = vrot.slane %v713, %v716
        %v718 = vmul.f32 %v711, %v717
        %v719 = vmul.f32 %v712, %v717
        %v720 = vadd.f32 %v642, %v718
        %v721 = vadd.f32 %v643, %v719
        %v722 = vld [vmem:[#allocation5 + $0x12] sm:$0x1]
        %v723 = vlaneseq
        %v724 = vshrl.u32 %v723, 7
        %v725 = vsub.s32 0, %v724
        %v726 = vrot.slane %v722, %v725
        %v727 = vsub.f32 %v681, %v726
        %v728 = vsub.f32 %v685, %v726
        %v729 = vld [vmem:[#allocation5 + $0x2] sm:$0x1]
        %v730 = vlaneseq
        %v731 = vshrl.u32 %v730, 7
        %v732 = vsub.s32 0, %v731
        %v733 = vrot.slane %v729, %v732
        %v734 = vmul.f32 %v727, %v733
        %v735 = vmul.f32 %v728, %v733
        %v736 = vmul.f32 %v734, %v734
        %v737 = vmul.f32 %v735, %v735
        %v738 = vsub.f32 %v736, 1.0
        %v739 = vsub.f32 %v737, 1.0
        %v740 = vmul.f32 %v736, -0.5
        %v741 = vmul.f32 %v737, -0.5
        %v742 = vmul.f32 %v740, 1.442695
        %v743 = vpow.pop %v742
        %v744 = vmul.f32 %v741, 1.442695
        %v745 = vpow.pop %v744
        %v746 = vmul.f32 %v738, %v743
        %v747 = vmul.f32 %v739, %v745
        %v748 = vld [vmem:[#allocation5 + $0x22] sm:$0x1]
        %v749 = vlaneseq
        %v750 = vshrl.u32 %v749, 7
        %v751 = vsub.s32 0, %v750
        %v752 = vrot.slane %v748, %v751
        %v753 = vmul.f32 %v746, %v752
        %v754 = vmul.f32 %v747, %v752
        %v755 = vadd.f32 %v677, %v753
        %v756 = vadd.f32 %v678, %v754
        %757 = vset.pattern.permute.xlu0 3
        %758 = vperm.xlu0 %757, %v361
        %v759 = vpop.permute.xlu0 %758
        %761 = vset.pattern.permute.xlu0 3
        %762 = vperm.xlu0 %761, %v362
        %v763 = vpop.permute.xlu0 %762
        %v765 = vld [vmem:[#allocation2 + $0x13] sm:$0x1]
        %v766 = vlaneseq
        %v767 = vshrl.u32 %v766, 7
        %v768 = vsub.s32 0, %v767
        %v769 = vrot.slane %v765, %v768
        %v770 = vsub.f32 %v759, %v769
        %v771 = vsub.f32 %v763, %v769
        %v772 = vld [vmem:[#allocation2 + $0x3] sm:$0x1]
        %v773 = vlaneseq
        %v774 = vshrl.u32 %v773, 7
        %v775 = vsub.s32 0, %v774
        %v776 = vrot.slane %v772, %v775
        %v777 = vmul.f32 %v770, %v776
        %v778 = vmul.f32 %v771, %v776
        %v779 = vmul.f32 %v777, %v777
        %v780 = vmul.f32 %v778, %v778
        %v781 = vsub.f32 %v779, 1.0
        %v782 = vsub.f32 %v780, 1.0
        %v783 = vmul.f32 %v779, -0.5
        %v784 = vmul.f32 %v780, -0.5
        %v785 = vmul.f32 %v783, 1.442695
        %v786 = vpow.pop %v785
        %v787 = vmul.f32 %v784, 1.442695
        %v788 = vpow.pop %v787
        %v789 = vmul.f32 %v781, %v786
        %v790 = vmul.f32 %v782, %v788
        %v791 = vld [vmem:[#allocation2 + $0x23] sm:$0x1]
        %v792 = vlaneseq
        %v793 = vshrl.u32 %v792, 7
        %v794 = vsub.s32 0, %v793
        %v795 = vrot.slane %v791, %v794
        %v796 = vmul.f32 %v789, %v795
        %v797 = vmul.f32 %v790, %v795
        %v798 = vadd.f32 %v720, %v796
        %v799 = vadd.f32 %v721, %v797
        %v800 = vld [vmem:[#allocation5 + $0x13] sm:$0x1]
        %v801 = vlaneseq
        %v802 = vshrl.u32 %v801, 7
        %v803 = vsub.s32 0, %v802
        %v804 = vrot.slane %v800, %v803
        %v805 = vsub.f32 %v759, %v804
        %v806 = vsub.f32 %v763, %v804
        %v807 = vld [vmem:[#allocation5 + $0x3] sm:$0x1]
        %v808 = vlaneseq
        %v809 = vshrl.u32 %v808, 7
        %v810 = vsub.s32 0, %v809
        %v811 = vrot.slane %v807, %v810
        %v812 = vmul.f32 %v805, %v811
        %v813 = vmul.f32 %v806, %v811
        %v814 = vmul.f32 %v812, %v812
        %v815 = vmul.f32 %v813, %v813
        %v816 = vsub.f32 %v814, 1.0
        %v817 = vsub.f32 %v815, 1.0
        %v818 = vmul.f32 %v814, -0.5
        %v819 = vmul.f32 %v815, -0.5
        %v820 = vmul.f32 %v818, 1.442695
        %v821 = vpow.pop %v820
        %v822 = vmul.f32 %v819, 1.442695
        %v823 = vpow.pop %v822
        %v824 = vmul.f32 %v816, %v821
        %v825 = vmul.f32 %v817, %v823
        %v826 = vld [vmem:[#allocation5 + $0x23] sm:$0x1]
        %v827 = vlaneseq
        %v828 = vshrl.u32 %v827, 7
        %v829 = vsub.s32 0, %v828
        %v830 = vrot.slane %v826, %v829
        %v831 = vmul.f32 %v824, %v830
        %v832 = vmul.f32 %v825, %v830
        %v833 = vadd.f32 %v755, %v831
        %v834 = vadd.f32 %v756, %v832
        %835 = vset.pattern.permute.xlu0 4
        %836 = vperm.xlu0 %835, %v361
        %v837 = vpop.permute.xlu0 %836
        %839 = vset.pattern.permute.xlu0 4
        %840 = vperm.xlu0 %839, %v362
        %v841 = vpop.permute.xlu0 %840
        %v843 = vld [vmem:[#allocation2 + $0x14] sm:$0x1]
        %v844 = vlaneseq
        %v845 = vshrl.u32 %v844, 7
        %v846 = vsub.s32 0, %v845
        %v847 = vrot.slane %v843, %v846
        %v848 = vsub.f32 %v837, %v847
        %v849 = vsub.f32 %v841, %v847
        %v850 = vld [vmem:[#allocation2 + $0x4] sm:$0x1]
        %v851 = vlaneseq
        %v852 = vshrl.u32 %v851, 7
        %v853 = vsub.s32 0, %v852
        %v854 = vrot.slane %v850, %v853
        %v855 = vmul.f32 %v848, %v854
        %v856 = vmul.f32 %v849, %v854
        %v857 = vmul.f32 %v855, %v855
        %v858 = vmul.f32 %v856, %v856
        %v859 = vsub.f32 %v857, 1.0
        %v860 = vsub.f32 %v858, 1.0
        %v861 = vmul.f32 %v857, -0.5
        %v862 = vmul.f32 %v858, -0.5
        %v863 = vmul.f32 %v861, 1.442695
        %v864 = vpow.pop %v863
        %v865 = vmul.f32 %v862, 1.442695
        %v866 = vpow.pop %v865
        %v867 = vmul.f32 %v859, %v864
        %v868 = vmul.f32 %v860, %v866
        %v869 = vld [vmem:[#allocation2 + $0x24] sm:$0x1]
        %v870 = vlaneseq
        %v871 = vshrl.u32 %v870, 7
        %v872 = vsub.s32 0, %v871
        %v873 = vrot.slane %v869, %v872
        %v874 = vmul.f32 %v867, %v873
        %v875 = vmul.f32 %v868, %v873
        %v876 = vadd.f32 %v798, %v874
        %v877 = vadd.f32 %v799, %v875
        %v878 = vld [vmem:[#allocation5 + $0x14] sm:$0x1]
        %v879 = vlaneseq
        %v880 = vshrl.u32 %v879, 7
        %v881 = vsub.s32 0, %v880
        %v882 = vrot.slane %v878, %v881
        %v883 = vsub.f32 %v837, %v882
        %v884 = vsub.f32 %v841, %v882
        %v885 = vld [vmem:[#allocation5 + $0x4] sm:$0x1]
        %v886 = vlaneseq
        %v887 = vshrl.u32 %v886, 7
        %v888 = vsub.s32 0, %v887
        %v889 = vrot.slane %v885, %v888
        %v890 = vmul.f32 %v883, %v889
        %v891 = vmul.f32 %v884, %v889
        %v892 = vmul.f32 %v890, %v890
        %v893 = vmul.f32 %v891, %v891
        %v894 = vsub.f32 %v892, 1.0
        %v895 = vsub.f32 %v893, 1.0
        %v896 = vmul.f32 %v892, -0.5
        %v897 = vmul.f32 %v893, -0.5
        %v898 = vmul.f32 %v896, 1.442695
        %v899 = vpow.pop %v898
        %v900 = vmul.f32 %v897, 1.442695
        %v901 = vpow.pop %v900
        %v902 = vmul.f32 %v894, %v899
        %v903 = vmul.f32 %v895, %v901
        %v904 = vld [vmem:[#allocation5 + $0x24] sm:$0x1]
        %v905 = vlaneseq
        %v906 = vshrl.u32 %v905, 7
        %v907 = vsub.s32 0, %v906
        %v908 = vrot.slane %v904, %v907
        %v909 = vmul.f32 %v902, %v908
        %v910 = vmul.f32 %v903, %v908
        %v911 = vadd.f32 %v833, %v909
        %v912 = vadd.f32 %v834, %v910
        %913 = vset.pattern.permute.xlu0 5
        %914 = vperm.xlu0 %913, %v361
        %v915 = vpop.permute.xlu0 %914
        %917 = vset.pattern.permute.xlu0 5
        %918 = vperm.xlu0 %917, %v362
        %v919 = vpop.permute.xlu0 %918
        %v921 = vld [vmem:[#allocation2 + $0x15] sm:$0x1]
        %v922 = vlaneseq
        %v923 = vshrl.u32 %v922, 7
        %v924 = vsub.s32 0, %v923
        %v925 = vrot.slane %v921, %v924
        %v926 = vsub.f32 %v915, %v925
        %v927 = vsub.f32 %v919, %v925
        %v928 = vld [vmem:[#allocation2 + $0x5] sm:$0x1]
        %v929 = vlaneseq
        %v930 = vshrl.u32 %v929, 7
        %v931 = vsub.s32 0, %v930
        %v932 = vrot.slane %v928, %v931
        %v933 = vmul.f32 %v926, %v932
        %v934 = vmul.f32 %v927, %v932
        %v935 = vmul.f32 %v933, %v933
        %v936 = vmul.f32 %v934, %v934
        %v937 = vsub.f32 %v935, 1.0
        %v938 = vsub.f32 %v936, 1.0
        %v939 = vmul.f32 %v935, -0.5
        %v940 = vmul.f32 %v936, -0.5
        %v941 = vmul.f32 %v939, 1.442695
        %v942 = vpow.pop %v941
        %v943 = vmul.f32 %v940, 1.442695
        %v944 = vpow.pop %v943
        %v945 = vmul.f32 %v937, %v942
        %v946 = vmul.f32 %v938, %v944
        %v947 = vld [vmem:[#allocation2 + $0x25] sm:$0x1]
        %v948 = vlaneseq
        %v949 = vshrl.u32 %v948, 7
        %v950 = vsub.s32 0, %v949
        %v951 = vrot.slane %v947, %v950
        %v952 = vmul.f32 %v945, %v951
        %v953 = vmul.f32 %v946, %v951
        %v954 = vadd.f32 %v876, %v952
        %v955 = vadd.f32 %v877, %v953
        %v956 = vld [vmem:[#allocation5 + $0x15] sm:$0x1]
        %v957 = vlaneseq
        %v958 = vshrl.u32 %v957, 7
        %v959 = vsub.s32 0, %v958
        %v960 = vrot.slane %v956, %v959
        %v961 = vsub.f32 %v915, %v960
        %v962 = vsub.f32 %v919, %v960
        %v963 = vld [vmem:[#allocation5 + $0x5] sm:$0x1]
        %v964 = vlaneseq
        %v965 = vshrl.u32 %v964, 7
        %v966 = vsub.s32 0, %v965
        %v967 = vrot.slane %v963, %v966
        %v968 = vmul.f32 %v961, %v967
        %v969 = vmul.f32 %v962, %v967
        %v970 = vmul.f32 %v968, %v968
        %v971 = vmul.f32 %v969, %v969
        %v972 = vsub.f32 %v970, 1.0
        %v973 = vsub.f32 %v971, 1.0
        %v974 = vmul.f32 %v970, -0.5
        %v975 = vmul.f32 %v971, -0.5
        %v976 = vmul.f32 %v974, 1.442695
        %v977 = vpow.pop %v976
        %v978 = vmul.f32 %v975, 1.442695
        %v979 = vpow.pop %v978
        %v980 = vmul.f32 %v972, %v977
        %v981 = vmul.f32 %v973, %v979
        %v982 = vld [vmem:[#allocation5 + $0x25] sm:$0x1]
        %v983 = vlaneseq
        %v984 = vshrl.u32 %v983, 7
        %v985 = vsub.s32 0, %v984
        %v986 = vrot.slane %v982, %v985
        %v987 = vmul.f32 %v980, %v986
        %v988 = vmul.f32 %v981, %v986
        %v989 = vadd.f32 %v911, %v987
        %v990 = vadd.f32 %v912, %v988
        %991 = vset.pattern.permute.xlu0 6
        %992 = vperm.xlu0 %991, %v361
        %v993 = vpop.permute.xlu0 %992
        %995 = vset.pattern.permute.xlu0 6
        %996 = vperm.xlu0 %995, %v362
        %v997 = vpop.permute.xlu0 %996
        %v999 = vld [vmem:[#allocation2 + $0x16] sm:$0x1]
        %v1000 = vlaneseq
        %v1001 = vshrl.u32 %v1000, 7
        %v1002 = vsub.s32 0, %v1001
        %v1003 = vrot.slane %v999, %v1002
        %v1004 = vsub.f32 %v993, %v1003
        %v1005 = vsub.f32 %v997, %v1003
        %v1006 = vld [vmem:[#allocation2 + $0x6] sm:$0x1]
        %v1007 = vlaneseq
        %v1008 = vshrl.u32 %v1007, 7
        %v1009 = vsub.s32 0, %v1008
        %v1010 = vrot.slane %v1006, %v1009
        %v1011 = vmul.f32 %v1004, %v1010
        %v1012 = vmul.f32 %v1005, %v1010
        %v1013 = vmul.f32 %v1011, %v1011
        %v1014 = vmul.f32 %v1012, %v1012
        %v1015 = vsub.f32 %v1013, 1.0
        %v1016 = vsub.f32 %v1014, 1.0
        %v1017 = vmul.f32 %v1013, -0.5
        %v1018 = vmul.f32 %v1014, -0.5
        %v1019 = vmul.f32 %v1017, 1.442695
        %v1020 = vpow.pop %v1019
        %v1021 = vmul.f32 %v1018, 1.442695
        %v1022 = vpow.pop %v1021
        %v1023 = vmul.f32 %v1015, %v1020
        %v1024 = vmul.f32 %v1016, %v1022
        %v1025 = vld [vmem:[#allocation2 + $0x26] sm:$0x1]
        %v1026 = vlaneseq
        %v1027 = vshrl.u32 %v1026, 7
        %v1028 = vsub.s32 0, %v1027
        %v1029 = vrot.slane %v1025, %v1028
        %v1030 = vmul.f32 %v1023, %v1029
        %v1031 = vmul.f32 %v1024, %v1029
        %v1032 = vadd.f32 %v954, %v1030
        %v1033 = vadd.f32 %v955, %v1031
        %v1034 = vld [vmem:[#allocation5 + $0x16] sm:$0x1]
        %v1035 = vlaneseq
        %v1036 = vshrl.u32 %v1035, 7
        %v1037 = vsub.s32 0, %v1036
        %v1038 = vrot.slane %v1034, %v1037
        %v1039 = vsub.f32 %v993, %v1038
        %v1040 = vsub.f32 %v997, %v1038
        %v1041 = vld [vmem:[#allocation5 + $0x6] sm:$0x1]
        %v1042 = vlaneseq
        %v1043 = vshrl.u32 %v1042, 7
        %v1044 = vsub.s32 0, %v1043
        %v1045 = vrot.slane %v1041, %v1044
        %v1046 = vmul.f32 %v1039, %v1045
        %v1047 = vmul.f32 %v1040, %v1045
        %v1048 = vmul.f32 %v1046, %v1046
        %v1049 = vmul.f32 %v1047, %v1047
        %v1050 = vsub.f32 %v1048, 1.0
        %v1051 = vsub.f32 %v1049, 1.0
        %v1052 = vmul.f32 %v1048, -0.5
        %v1053 = vmul.f32 %v1049, -0.5
        %v1054 = vmul.f32 %v1052, 1.442695
        %v1055 = vpow.pop %v1054
        %v1056 = vmul.f32 %v1053, 1.442695
        %v1057 = vpow.pop %v1056
        %v1058 = vmul.f32 %v1050, %v1055
        %v1059 = vmul.f32 %v1051, %v1057
        %v1060 = vld [vmem:[#allocation5 + $0x26] sm:$0x1]
        %v1061 = vlaneseq
        %v1062 = vshrl.u32 %v1061, 7
        %v1063 = vsub.s32 0, %v1062
        %v1064 = vrot.slane %v1060, %v1063
        %v1065 = vmul.f32 %v1058, %v1064
        %v1066 = vmul.f32 %v1059, %v1064
        %v1067 = vadd.f32 %v989, %v1065
        %v1068 = vadd.f32 %v990, %v1066
        %1069 = vset.pattern.permute.xlu0 7
        %1070 = vperm.xlu0 %1069, %v361
        %v1071 = vpop.permute.xlu0 %1070
        %1073 = vset.pattern.permute.xlu0 7
        %1074 = vperm.xlu0 %1073, %v362
        %v1075 = vpop.permute.xlu0 %1074
        %v1077 = vld [vmem:[#allocation2 + $0x17] sm:$0x1]
        %v1078 = vlaneseq
        %v1079 = vshrl.u32 %v1078, 7
        %v1080 = vsub.s32 0, %v1079
        %v1081 = vrot.slane %v1077, %v1080
        %v1082 = vsub.f32 %v1071, %v1081
        %v1083 = vsub.f32 %v1075, %v1081
        %v1084 = vld [vmem:[#allocation2 + $0x7] sm:$0x1]
        %v1085 = vlaneseq
        %v1086 = vshrl.u32 %v1085, 7
        %v1087 = vsub.s32 0, %v1086
        %v1088 = vrot.slane %v1084, %v1087
        %v1089 = vmul.f32 %v1082, %v1088
        %v1090 = vmul.f32 %v1083, %v1088
        %v1091 = vmul.f32 %v1089, %v1089
        %v1092 = vmul.f32 %v1090, %v1090
        %v1093 = vsub.f32 %v1091, 1.0
        %v1094 = vsub.f32 %v1092, 1.0
        %v1095 = vmul.f32 %v1091, -0.5
        %v1096 = vmul.f32 %v1092, -0.5
        %v1097 = vmul.f32 %v1095, 1.442695
        %v1098 = vpow.pop %v1097
        %v1099 = vmul.f32 %v1096, 1.442695
        %v1100 = vpow.pop %v1099
        %v1101 = vmul.f32 %v1093, %v1098
        %v1102 = vmul.f32 %v1094, %v1100
        %v1103 = vld [vmem:[#allocation2 + $0x27] sm:$0x1]
        %v1104 = vlaneseq
        %v1105 = vshrl.u32 %v1104, 7
        %v1106 = vsub.s32 0, %v1105
        %v1107 = vrot.slane %v1103, %v1106
        %v1108 = vmul.f32 %v1101, %v1107
        %v1109 = vmul.f32 %v1102, %v1107
        %v1110 = vadd.f32 %v1032, %v1108
        %v1111 = vadd.f32 %v1033, %v1109
        %v1112 = vld [vmem:[#allocation5 + $0x17] sm:$0x1]
        %v1113 = vlaneseq
        %v1114 = vshrl.u32 %v1113, 7
        %v1115 = vsub.s32 0, %v1114
        %v1116 = vrot.slane %v1112, %v1115
        %v1117 = vsub.f32 %v1071, %v1116
        %v1118 = vsub.f32 %v1075, %v1116
        %v1119 = vld [vmem:[#allocation5 + $0x7] sm:$0x1]
        %v1120 = vlaneseq
        %v1121 = vshrl.u32 %v1120, 7
        %v1122 = vsub.s32 0, %v1121
        %v1123 = vrot.slane %v1119, %v1122
        %v1124 = vmul.f32 %v1117, %v1123
        %v1125 = vmul.f32 %v1118, %v1123
        %v1126 = vmul.f32 %v1124, %v1124
        %v1127 = vmul.f32 %v1125, %v1125
        %v1128 = vsub.f32 %v1126, 1.0
        %v1129 = vsub.f32 %v1127, 1.0
        %v1130 = vmul.f32 %v1126, -0.5
        %v1131 = vmul.f32 %v1127, -0.5
        %v1132 = vmul.f32 %v1130, 1.442695
        %v1133 = vpow.pop %v1132
        %v1134 = vmul.f32 %v1131, 1.442695
        %v1135 = vpow.pop %v1134
        %v1136 = vmul.f32 %v1128, %v1133
        %v1137 = vmul.f32 %v1129, %v1135
        %v1138 = vld [vmem:[#allocation5 + $0x27] sm:$0x1]
        %v1139 = vlaneseq
        %v1140 = vshrl.u32 %v1139, 7
        %v1141 = vsub.s32 0, %v1140
        %v1142 = vrot.slane %v1138, %v1141
        %v1143 = vmul.f32 %v1136, %v1142
        %v1144 = vmul.f32 %v1137, %v1142
        %v1145 = vadd.f32 %v1067, %v1143
        %v1146 = vadd.f32 %v1068, %v1144
        %1147 = vset.pattern.permute.xlu0 8
        %1148 = vperm.xlu0 %1147, %v361
        %v1149 = vpop.permute.xlu0 %1148
        %1151 = vset.pattern.permute.xlu0 8
        %1152 = vperm.xlu0 %1151, %v362
        %v1153 = vpop.permute.xlu0 %1152
        %v1155 = vld [vmem:[#allocation2 + $0x18] sm:$0x1]
        %v1156 = vlaneseq
        %v1157 = vshrl.u32 %v1156, 7
        %v1158 = vsub.s32 0, %v1157
        %v1159 = vrot.slane %v1155, %v1158
        %v1160 = vsub.f32 %v1149, %v1159
        %v1161 = vsub.f32 %v1153, %v1159
        %v1162 = vld [vmem:[#allocation2 + $0x8] sm:$0x1]
        %v1163 = vlaneseq
        %v1164 = vshrl.u32 %v1163, 7
        %v1165 = vsub.s32 0, %v1164
        %v1166 = vrot.slane %v1162, %v1165
        %v1167 = vmul.f32 %v1160, %v1166
        %v1168 = vmul.f32 %v1161, %v1166
        %v1169 = vmul.f32 %v1167, %v1167
        %v1170 = vmul.f32 %v1168, %v1168
        %v1171 = vsub.f32 %v1169, 1.0
        %v1172 = vsub.f32 %v1170, 1.0
        %v1173 = vmul.f32 %v1169, -0.5
        %v1174 = vmul.f32 %v1170, -0.5
        %v1175 = vmul.f32 %v1173, 1.442695
        %v1176 = vpow.pop %v1175
        %v1177 = vmul.f32 %v1174, 1.442695
        %v1178 = vpow.pop %v1177
        %v1179 = vmul.f32 %v1171, %v1176
        %v1180 = vmul.f32 %v1172, %v1178
        %v1181 = vld [vmem:[#allocation2 + $0x28] sm:$0x1]
        %v1182 = vlaneseq
        %v1183 = vshrl.u32 %v1182, 7
        %v1184 = vsub.s32 0, %v1183
        %v1185 = vrot.slane %v1181, %v1184
        %v1186 = vmul.f32 %v1179, %v1185
        %v1187 = vmul.f32 %v1180, %v1185
        %v1188 = vadd.f32 %v1110, %v1186
        %v1189 = vadd.f32 %v1111, %v1187
        %v1190 = vld [vmem:[#allocation5 + $0x18] sm:$0x1]
        %v1191 = vlaneseq
        %v1192 = vshrl.u32 %v1191, 7
        %v1193 = vsub.s32 0, %v1192
        %v1194 = vrot.slane %v1190, %v1193
        %v1195 = vsub.f32 %v1149, %v1194
        %v1196 = vsub.f32 %v1153, %v1194
        %v1197 = vld [vmem:[#allocation5 + $0x8] sm:$0x1]
        %v1198 = vlaneseq
        %v1199 = vshrl.u32 %v1198, 7
        %v1200 = vsub.s32 0, %v1199
        %v1201 = vrot.slane %v1197, %v1200
        %v1202 = vmul.f32 %v1195, %v1201
        %v1203 = vmul.f32 %v1196, %v1201
        %v1204 = vmul.f32 %v1202, %v1202
        %v1205 = vmul.f32 %v1203, %v1203
        %v1206 = vsub.f32 %v1204, 1.0
        %v1207 = vsub.f32 %v1205, 1.0
        %v1208 = vmul.f32 %v1204, -0.5
        %v1209 = vmul.f32 %v1205, -0.5
        %v1210 = vmul.f32 %v1208, 1.442695
        %v1211 = vpow.pop %v1210
        %v1212 = vmul.f32 %v1209, 1.442695
        %v1213 = vpow.pop %v1212
        %v1214 = vmul.f32 %v1206, %v1211
        %v1215 = vmul.f32 %v1207, %v1213
        %v1216 = vld [vmem:[#allocation5 + $0x28] sm:$0x1]
        %v1217 = vlaneseq
        %v1218 = vshrl.u32 %v1217, 7
        %v1219 = vsub.s32 0, %v1218
        %v1220 = vrot.slane %v1216, %v1219
        %v1221 = vmul.f32 %v1214, %v1220
        %v1222 = vmul.f32 %v1215, %v1220
        %v1223 = vadd.f32 %v1145, %v1221
        %v1224 = vadd.f32 %v1146, %v1222
        %1225 = vset.pattern.permute.xlu0 9
        %1226 = vperm.xlu0 %1225, %v361
        %v1227 = vpop.permute.xlu0 %1226
        %1229 = vset.pattern.permute.xlu0 9
        %1230 = vperm.xlu0 %1229, %v362
        %v1231 = vpop.permute.xlu0 %1230
        %v1233 = vld [vmem:[#allocation2 + $0x19] sm:$0x1]
        %v1234 = vlaneseq
        %v1235 = vshrl.u32 %v1234, 7
        %v1236 = vsub.s32 0, %v1235
        %v1237 = vrot.slane %v1233, %v1236
        %v1238 = vsub.f32 %v1227, %v1237
        %v1239 = vsub.f32 %v1231, %v1237
        %v1240 = vld [vmem:[#allocation2 + $0x9] sm:$0x1]
        %v1241 = vlaneseq
        %v1242 = vshrl.u32 %v1241, 7
        %v1243 = vsub.s32 0, %v1242
        %v1244 = vrot.slane %v1240, %v1243
        %v1245 = vmul.f32 %v1238, %v1244
        %v1246 = vmul.f32 %v1239, %v1244
        %v1247 = vmul.f32 %v1245, %v1245
        %v1248 = vmul.f32 %v1246, %v1246
        %v1249 = vsub.f32 %v1247, 1.0
        %v1250 = vsub.f32 %v1248, 1.0
        %v1251 = vmul.f32 %v1247, -0.5
        %v1252 = vmul.f32 %v1248, -0.5
        %v1253 = vmul.f32 %v1251, 1.442695
        %v1254 = vpow.pop %v1253
        %v1255 = vmul.f32 %v1252, 1.442695
        %v1256 = vpow.pop %v1255
        %v1257 = vmul.f32 %v1249, %v1254
        %v1258 = vmul.f32 %v1250, %v1256
        %v1259 = vld [vmem:[#allocation2 + $0x29] sm:$0x1]
        %v1260 = vlaneseq
        %v1261 = vshrl.u32 %v1260, 7
        %v1262 = vsub.s32 0, %v1261
        %v1263 = vrot.slane %v1259, %v1262
        %v1264 = vmul.f32 %v1257, %v1263
        %v1265 = vmul.f32 %v1258, %v1263
        %v1266 = vadd.f32 %v1188, %v1264
        %v1267 = vadd.f32 %v1189, %v1265
        %v1268 = vld [vmem:[#allocation5 + $0x19] sm:$0x1]
        %v1269 = vlaneseq
        %v1270 = vshrl.u32 %v1269, 7
        %v1271 = vsub.s32 0, %v1270
        %v1272 = vrot.slane %v1268, %v1271
        %v1273 = vsub.f32 %v1227, %v1272
        %v1274 = vsub.f32 %v1231, %v1272
        %v1275 = vld [vmem:[#allocation5 + $0x9] sm:$0x1]
        %v1276 = vlaneseq
        %v1277 = vshrl.u32 %v1276, 7
        %v1278 = vsub.s32 0, %v1277
        %v1279 = vrot.slane %v1275, %v1278
        %v1280 = vmul.f32 %v1273, %v1279
        %v1281 = vmul.f32 %v1274, %v1279
        %v1282 = vmul.f32 %v1280, %v1280
        %v1283 = vmul.f32 %v1281, %v1281
        %v1284 = vsub.f32 %v1282, 1.0
        %v1285 = vsub.f32 %v1283, 1.0
        %v1286 = vmul.f32 %v1282, -0.5
        %v1287 = vmul.f32 %v1283, -0.5
        %v1288 = vmul.f32 %v1286, 1.442695
        %v1289 = vpow.pop %v1288
        %v1290 = vmul.f32 %v1287, 1.442695
        %v1291 = vpow.pop %v1290
        %v1292 = vmul.f32 %v1284, %v1289
        %v1293 = vmul.f32 %v1285, %v1291
        %v1294 = vld [vmem:[#allocation5 + $0x29] sm:$0x1]
        %v1295 = vlaneseq
        %v1296 = vshrl.u32 %v1295, 7
        %v1297 = vsub.s32 0, %v1296
        %v1298 = vrot.slane %v1294, %v1297
        %v1299 = vmul.f32 %v1292, %v1298
        %v1300 = vmul.f32 %v1293, %v1298
        %v1301 = vadd.f32 %v1223, %v1299
        %v1302 = vadd.f32 %v1224, %v1300
        %1303 = vset.pattern.permute.xlu0 10
        %1304 = vperm.xlu0 %1303, %v361
        %v1305 = vpop.permute.xlu0 %1304
        %1307 = vset.pattern.permute.xlu0 10
        %1308 = vperm.xlu0 %1307, %v362
        %v1309 = vpop.permute.xlu0 %1308
        %v1311 = vld [vmem:[#allocation2 + $0x1a] sm:$0x1]
        %v1312 = vlaneseq
        %v1313 = vshrl.u32 %v1312, 7
        %v1314 = vsub.s32 0, %v1313
        %v1315 = vrot.slane %v1311, %v1314
        %v1316 = vsub.f32 %v1305, %v1315
        %v1317 = vsub.f32 %v1309, %v1315
        %v1318 = vld [vmem:[#allocation2 + $0xa] sm:$0x1]
        %v1319 = vlaneseq
        %v1320 = vshrl.u32 %v1319, 7
        %v1321 = vsub.s32 0, %v1320
        %v1322 = vrot.slane %v1318, %v1321
        %v1323 = vmul.f32 %v1316, %v1322
        %v1324 = vmul.f32 %v1317, %v1322
        %v1325 = vmul.f32 %v1323, %v1323
        %v1326 = vmul.f32 %v1324, %v1324
        %v1327 = vsub.f32 %v1325, 1.0
        %v1328 = vsub.f32 %v1326, 1.0
        %v1329 = vmul.f32 %v1325, -0.5
        %v1330 = vmul.f32 %v1326, -0.5
        %v1331 = vmul.f32 %v1329, 1.442695
        %v1332 = vpow.pop %v1331
        %v1333 = vmul.f32 %v1330, 1.442695
        %v1334 = vpow.pop %v1333
        %v1335 = vmul.f32 %v1327, %v1332
        %v1336 = vmul.f32 %v1328, %v1334
        %v1337 = vld [vmem:[#allocation2 + $0x2a] sm:$0x1]
        %v1338 = vlaneseq
        %v1339 = vshrl.u32 %v1338, 7
        %v1340 = vsub.s32 0, %v1339
        %v1341 = vrot.slane %v1337, %v1340
        %v1342 = vmul.f32 %v1335, %v1341
        %v1343 = vmul.f32 %v1336, %v1341
        %v1344 = vadd.f32 %v1266, %v1342
        %v1345 = vadd.f32 %v1267, %v1343
        %v1346 = vld [vmem:[#allocation5 + $0x1a] sm:$0x1]
        %v1347 = vlaneseq
        %v1348 = vshrl.u32 %v1347, 7
        %v1349 = vsub.s32 0, %v1348
        %v1350 = vrot.slane %v1346, %v1349
        %v1351 = vsub.f32 %v1305, %v1350
        %v1352 = vsub.f32 %v1309, %v1350
        %v1353 = vld [vmem:[#allocation5 + $0xa] sm:$0x1]
        %v1354 = vlaneseq
        %v1355 = vshrl.u32 %v1354, 7
        %v1356 = vsub.s32 0, %v1355
        %v1357 = vrot.slane %v1353, %v1356
        %v1358 = vmul.f32 %v1351, %v1357
        %v1359 = vmul.f32 %v1352, %v1357
        %v1360 = vmul.f32 %v1358, %v1358
        %v1361 = vmul.f32 %v1359, %v1359
        %v1362 = vsub.f32 %v1360, 1.0
        %v1363 = vsub.f32 %v1361, 1.0
        %v1364 = vmul.f32 %v1360, -0.5
        %v1365 = vmul.f32 %v1361, -0.5
        %v1366 = vmul.f32 %v1364, 1.442695
        %v1367 = vpow.pop %v1366
        %v1368 = vmul.f32 %v1365, 1.442695
        %v1369 = vpow.pop %v1368
        %v1370 = vmul.f32 %v1362, %v1367
        %v1371 = vmul.f32 %v1363, %v1369
        %v1372 = vld [vmem:[#allocation5 + $0x2a] sm:$0x1]
        %v1373 = vlaneseq
        %v1374 = vshrl.u32 %v1373, 7
        %v1375 = vsub.s32 0, %v1374
        %v1376 = vrot.slane %v1372, %v1375
        %v1377 = vmul.f32 %v1370, %v1376
        %v1378 = vmul.f32 %v1371, %v1376
        %v1379 = vadd.f32 %v1301, %v1377
        %v1380 = vadd.f32 %v1302, %v1378
        %1381 = vset.pattern.permute.xlu0 11
        %1382 = vperm.xlu0 %1381, %v361
        %v1383 = vpop.permute.xlu0 %1382
        %1385 = vset.pattern.permute.xlu0 11
        %1386 = vperm.xlu0 %1385, %v362
        %v1387 = vpop.permute.xlu0 %1386
        %v1389 = vld [vmem:[#allocation2 + $0x1b] sm:$0x1]
        %v1390 = vlaneseq
        %v1391 = vshrl.u32 %v1390, 7
        %v1392 = vsub.s32 0, %v1391
        %v1393 = vrot.slane %v1389, %v1392
        %v1394 = vsub.f32 %v1383, %v1393
        %v1395 = vsub.f32 %v1387, %v1393
        %v1396 = vld [vmem:[#allocation2 + $0xb] sm:$0x1]
        %v1397 = vlaneseq
        %v1398 = vshrl.u32 %v1397, 7
        %v1399 = vsub.s32 0, %v1398
        %v1400 = vrot.slane %v1396, %v1399
        %v1401 = vmul.f32 %v1394, %v1400
        %v1402 = vmul.f32 %v1395, %v1400
        %v1403 = vmul.f32 %v1401, %v1401
        %v1404 = vmul.f32 %v1402, %v1402
        %v1405 = vsub.f32 %v1403, 1.0
        %v1406 = vsub.f32 %v1404, 1.0
        %v1407 = vmul.f32 %v1403, -0.5
        %v1408 = vmul.f32 %v1404, -0.5
        %v1409 = vmul.f32 %v1407, 1.442695
        %v1410 = vpow.pop %v1409
        %v1411 = vmul.f32 %v1408, 1.442695
        %v1412 = vpow.pop %v1411
        %v1413 = vmul.f32 %v1405, %v1410
        %v1414 = vmul.f32 %v1406, %v1412
        %v1415 = vld [vmem:[#allocation2 + $0x2b] sm:$0x1]
        %v1416 = vlaneseq
        %v1417 = vshrl.u32 %v1416, 7
        %v1418 = vsub.s32 0, %v1417
        %v1419 = vrot.slane %v1415, %v1418
        %v1420 = vmul.f32 %v1413, %v1419
        %v1421 = vmul.f32 %v1414, %v1419
        %v1422 = vadd.f32 %v1344, %v1420
        %v1423 = vadd.f32 %v1345, %v1421
        %v1424 = vld [vmem:[#allocation5 + $0x1b] sm:$0x1]
        %v1425 = vlaneseq
        %v1426 = vshrl.u32 %v1425, 7
        %v1427 = vsub.s32 0, %v1426
        %v1428 = vrot.slane %v1424, %v1427
        %v1429 = vsub.f32 %v1383, %v1428
        %v1430 = vsub.f32 %v1387, %v1428
        %v1431 = vld [vmem:[#allocation5 + $0xb] sm:$0x1]
        %v1432 = vlaneseq
        %v1433 = vshrl.u32 %v1432, 7
        %v1434 = vsub.s32 0, %v1433
        %v1435 = vrot.slane %v1431, %v1434
        %v1436 = vmul.f32 %v1429, %v1435
        %v1437 = vmul.f32 %v1430, %v1435
        %v1438 = vmul.f32 %v1436, %v1436
        %v1439 = vmul.f32 %v1437, %v1437
        %v1440 = vsub.f32 %v1438, 1.0
        %v1441 = vsub.f32 %v1439, 1.0
        %v1442 = vmul.f32 %v1438, -0.5
        %v1443 = vmul.f32 %v1439, -0.5
        %v1444 = vmul.f32 %v1442, 1.442695
        %v1445 = vpow.pop %v1444
        %v1446 = vmul.f32 %v1443, 1.442695
        %v1447 = vpow.pop %v1446
        %v1448 = vmul.f32 %v1440, %v1445
        %v1449 = vmul.f32 %v1441, %v1447
        %v1450 = vld [vmem:[#allocation5 + $0x2b] sm:$0x1]
        %v1451 = vlaneseq
        %v1452 = vshrl.u32 %v1451, 7
        %v1453 = vsub.s32 0, %v1452
        %v1454 = vrot.slane %v1450, %v1453
        %v1455 = vmul.f32 %v1448, %v1454
        %v1456 = vmul.f32 %v1449, %v1454
        %v1457 = vadd.f32 %v1379, %v1455
        %v1458 = vadd.f32 %v1380, %v1456
        %1459 = vset.pattern.permute.xlu0 12
        %1460 = vperm.xlu0 %1459, %v361
        %v1461 = vpop.permute.xlu0 %1460
        %1463 = vset.pattern.permute.xlu0 12
        %1464 = vperm.xlu0 %1463, %v362
        %v1465 = vpop.permute.xlu0 %1464
        %v1467 = vld [vmem:[#allocation2 + $0x1c] sm:$0x1]
        %v1468 = vlaneseq
        %v1469 = vshrl.u32 %v1468, 7
        %v1470 = vsub.s32 0, %v1469
        %v1471 = vrot.slane %v1467, %v1470
        %v1472 = vsub.f32 %v1461, %v1471
        %v1473 = vsub.f32 %v1465, %v1471
        %v1474 = vld [vmem:[#allocation2 + $0xc] sm:$0x1]
        %v1475 = vlaneseq
        %v1476 = vshrl.u32 %v1475, 7
        %v1477 = vsub.s32 0, %v1476
        %v1478 = vrot.slane %v1474, %v1477
        %v1479 = vmul.f32 %v1472, %v1478
        %v1480 = vmul.f32 %v1473, %v1478
        %v1481 = vmul.f32 %v1479, %v1479
        %v1482 = vmul.f32 %v1480, %v1480
        %v1483 = vsub.f32 %v1481, 1.0
        %v1484 = vsub.f32 %v1482, 1.0
        %v1485 = vmul.f32 %v1481, -0.5
        %v1486 = vmul.f32 %v1482, -0.5
        %v1487 = vmul.f32 %v1485, 1.442695
        %v1488 = vpow.pop %v1487
        %v1489 = vmul.f32 %v1486, 1.442695
        %v1490 = vpow.pop %v1489
        %v1491 = vmul.f32 %v1483, %v1488
        %v1492 = vmul.f32 %v1484, %v1490
        %v1493 = vld [vmem:[#allocation2 + $0x2c] sm:$0x1]
        %v1494 = vlaneseq
        %v1495 = vshrl.u32 %v1494, 7
        %v1496 = vsub.s32 0, %v1495
        %v1497 = vrot.slane %v1493, %v1496
        %v1498 = vmul.f32 %v1491, %v1497
        %v1499 = vmul.f32 %v1492, %v1497
        %v1500 = vadd.f32 %v1422, %v1498
        %v1501 = vadd.f32 %v1423, %v1499
        %v1502 = vld [vmem:[#allocation5 + $0x1c] sm:$0x1]
        %v1503 = vlaneseq
        %v1504 = vshrl.u32 %v1503, 7
        %v1505 = vsub.s32 0, %v1504
        %v1506 = vrot.slane %v1502, %v1505
        %v1507 = vsub.f32 %v1461, %v1506
        %v1508 = vsub.f32 %v1465, %v1506
        %v1509 = vld [vmem:[#allocation5 + $0xc] sm:$0x1]
        %v1510 = vlaneseq
        %v1511 = vshrl.u32 %v1510, 7
        %v1512 = vsub.s32 0, %v1511
        %v1513 = vrot.slane %v1509, %v1512
        %v1514 = vmul.f32 %v1507, %v1513
        %v1515 = vmul.f32 %v1508, %v1513
        %v1516 = vmul.f32 %v1514, %v1514
        %v1517 = vmul.f32 %v1515, %v1515
        %v1518 = vsub.f32 %v1516, 1.0
        %v1519 = vsub.f32 %v1517, 1.0
        %v1520 = vmul.f32 %v1516, -0.5
        %v1521 = vmul.f32 %v1517, -0.5
        %v1522 = vmul.f32 %v1520, 1.442695
        %v1523 = vpow.pop %v1522
        %v1524 = vmul.f32 %v1521, 1.442695
        %v1525 = vpow.pop %v1524
        %v1526 = vmul.f32 %v1518, %v1523
        %v1527 = vmul.f32 %v1519, %v1525
        %v1528 = vld [vmem:[#allocation5 + $0x2c] sm:$0x1]
        %v1529 = vlaneseq
        %v1530 = vshrl.u32 %v1529, 7
        %v1531 = vsub.s32 0, %v1530
        %v1532 = vrot.slane %v1528, %v1531
        %v1533 = vmul.f32 %v1526, %v1532
        %v1534 = vmul.f32 %v1527, %v1532
        %v1535 = vadd.f32 %v1457, %v1533
        %v1536 = vadd.f32 %v1458, %v1534
        %1537 = vset.pattern.permute.xlu0 13
        %1538 = vperm.xlu0 %1537, %v361
        %v1539 = vpop.permute.xlu0 %1538
        %1541 = vset.pattern.permute.xlu0 13
        %1542 = vperm.xlu0 %1541, %v362
        %v1543 = vpop.permute.xlu0 %1542
        %v1545 = vld [vmem:[#allocation2 + $0x1d] sm:$0x1]
        %v1546 = vlaneseq
        %v1547 = vshrl.u32 %v1546, 7
        %v1548 = vsub.s32 0, %v1547
        %v1549 = vrot.slane %v1545, %v1548
        %v1550 = vsub.f32 %v1539, %v1549
        %v1551 = vsub.f32 %v1543, %v1549
        %v1552 = vld [vmem:[#allocation2 + $0xd] sm:$0x1]
        %v1553 = vlaneseq
        %v1554 = vshrl.u32 %v1553, 7
        %v1555 = vsub.s32 0, %v1554
        %v1556 = vrot.slane %v1552, %v1555
        %v1557 = vmul.f32 %v1550, %v1556
        %v1558 = vmul.f32 %v1551, %v1556
        %v1559 = vmul.f32 %v1557, %v1557
        %v1560 = vmul.f32 %v1558, %v1558
        %v1561 = vsub.f32 %v1559, 1.0
        %v1562 = vsub.f32 %v1560, 1.0
        %v1563 = vmul.f32 %v1559, -0.5
        %v1564 = vmul.f32 %v1560, -0.5
        %v1565 = vmul.f32 %v1563, 1.442695
        %v1566 = vpow.pop %v1565
        %v1567 = vmul.f32 %v1564, 1.442695
        %v1568 = vpow.pop %v1567
        %v1569 = vmul.f32 %v1561, %v1566
        %v1570 = vmul.f32 %v1562, %v1568
        %v1571 = vld [vmem:[#allocation2 + $0x2d] sm:$0x1]
        %v1572 = vlaneseq
        %v1573 = vshrl.u32 %v1572, 7
        %v1574 = vsub.s32 0, %v1573
        %v1575 = vrot.slane %v1571, %v1574
        %v1576 = vmul.f32 %v1569, %v1575
        %v1577 = vmul.f32 %v1570, %v1575
        %v1578 = vadd.f32 %v1500, %v1576
        %v1579 = vadd.f32 %v1501, %v1577
        %v1580 = vld [vmem:[#allocation5 + $0x1d] sm:$0x1]
        %v1581 = vlaneseq
        %v1582 = vshrl.u32 %v1581, 7
        %v1583 = vsub.s32 0, %v1582
        %v1584 = vrot.slane %v1580, %v1583
        %v1585 = vsub.f32 %v1539, %v1584
        %v1586 = vsub.f32 %v1543, %v1584
        %v1587 = vld [vmem:[#allocation5 + $0xd] sm:$0x1]
        %v1588 = vlaneseq
        %v1589 = vshrl.u32 %v1588, 7
        %v1590 = vsub.s32 0, %v1589
        %v1591 = vrot.slane %v1587, %v1590
        %v1592 = vmul.f32 %v1585, %v1591
        %v1593 = vmul.f32 %v1586, %v1591
        %v1594 = vmul.f32 %v1592, %v1592
        %v1595 = vmul.f32 %v1593, %v1593
        %v1596 = vsub.f32 %v1594, 1.0
        %v1597 = vsub.f32 %v1595, 1.0
        %v1598 = vmul.f32 %v1594, -0.5
        %v1599 = vmul.f32 %v1595, -0.5
        %v1600 = vmul.f32 %v1598, 1.442695
        %v1601 = vpow.pop %v1600
        %v1602 = vmul.f32 %v1599, 1.442695
        %v1603 = vpow.pop %v1602
        %v1604 = vmul.f32 %v1596, %v1601
        %v1605 = vmul.f32 %v1597, %v1603
        %v1606 = vld [vmem:[#allocation5 + $0x2d] sm:$0x1]
        %v1607 = vlaneseq
        %v1608 = vshrl.u32 %v1607, 7
        %v1609 = vsub.s32 0, %v1608
        %v1610 = vrot.slane %v1606, %v1609
        %v1611 = vmul.f32 %v1604, %v1610
        %v1612 = vmul.f32 %v1605, %v1610
        %v1613 = vadd.f32 %v1535, %v1611
        %v1614 = vadd.f32 %v1536, %v1612
        %1615 = vset.pattern.permute.xlu0 14
        %1616 = vperm.xlu0 %1615, %v361
        %v1617 = vpop.permute.xlu0 %1616
        %1619 = vset.pattern.permute.xlu0 14
        %1620 = vperm.xlu0 %1619, %v362
        %v1621 = vpop.permute.xlu0 %1620
        %v1623 = vld [vmem:[#allocation2 + $0x1e] sm:$0x1]
        %v1624 = vlaneseq
        %v1625 = vshrl.u32 %v1624, 7
        %v1626 = vsub.s32 0, %v1625
        %v1627 = vrot.slane %v1623, %v1626
        %v1628 = vsub.f32 %v1617, %v1627
        %v1629 = vsub.f32 %v1621, %v1627
        %v1630 = vld [vmem:[#allocation2 + $0xe] sm:$0x1]
        %v1631 = vlaneseq
        %v1632 = vshrl.u32 %v1631, 7
        %v1633 = vsub.s32 0, %v1632
        %v1634 = vrot.slane %v1630, %v1633
        %v1635 = vmul.f32 %v1628, %v1634
        %v1636 = vmul.f32 %v1629, %v1634
        %v1637 = vmul.f32 %v1635, %v1635
        %v1638 = vmul.f32 %v1636, %v1636
        %v1639 = vsub.f32 %v1637, 1.0
        %v1640 = vsub.f32 %v1638, 1.0
        %v1641 = vmul.f32 %v1637, -0.5
        %v1642 = vmul.f32 %v1638, -0.5
        %v1643 = vmul.f32 %v1641, 1.442695
        %v1644 = vpow.pop %v1643
        %v1645 = vmul.f32 %v1642, 1.442695
        %v1646 = vpow.pop %v1645
        %v1647 = vmul.f32 %v1639, %v1644
        %v1648 = vmul.f32 %v1640, %v1646
        %v1649 = vld [vmem:[#allocation2 + $0x2e] sm:$0x1]
        %v1650 = vlaneseq
        %v1651 = vshrl.u32 %v1650, 7
        %v1652 = vsub.s32 0, %v1651
        %v1653 = vrot.slane %v1649, %v1652
        %v1654 = vmul.f32 %v1647, %v1653
        %v1655 = vmul.f32 %v1648, %v1653
        %v1656 = vadd.f32 %v1578, %v1654
        %v1657 = vadd.f32 %v1579, %v1655
        %v1658 = vld [vmem:[#allocation5 + $0x1e] sm:$0x1]
        %v1659 = vlaneseq
        %v1660 = vshrl.u32 %v1659, 7
        %v1661 = vsub.s32 0, %v1660
        %v1662 = vrot.slane %v1658, %v1661
        %v1663 = vsub.f32 %v1617, %v1662
        %v1664 = vsub.f32 %v1621, %v1662
        %v1665 = vld [vmem:[#allocation5 + $0xe] sm:$0x1]
        %v1666 = vlaneseq
        %v1667 = vshrl.u32 %v1666, 7
        %v1668 = vsub.s32 0, %v1667
        %v1669 = vrot.slane %v1665, %v1668
        %v1670 = vmul.f32 %v1663, %v1669
        %v1671 = vmul.f32 %v1664, %v1669
        %v1672 = vmul.f32 %v1670, %v1670
        %v1673 = vmul.f32 %v1671, %v1671
        %v1674 = vsub.f32 %v1672, 1.0
        %v1675 = vsub.f32 %v1673, 1.0
        %v1676 = vmul.f32 %v1672, -0.5
        %v1677 = vmul.f32 %v1673, -0.5
        %v1678 = vmul.f32 %v1676, 1.442695
        %v1679 = vpow.pop %v1678
        %v1680 = vmul.f32 %v1677, 1.442695
        %v1681 = vpow.pop %v1680
        %v1682 = vmul.f32 %v1674, %v1679
        %v1683 = vmul.f32 %v1675, %v1681
        %v1684 = vld [vmem:[#allocation5 + $0x2e] sm:$0x1]
        %v1685 = vlaneseq
        %v1686 = vshrl.u32 %v1685, 7
        %v1687 = vsub.s32 0, %v1686
        %v1688 = vrot.slane %v1684, %v1687
        %v1689 = vmul.f32 %v1682, %v1688
        %v1690 = vmul.f32 %v1683, %v1688
        %v1691 = vadd.f32 %v1613, %v1689
        %v1692 = vadd.f32 %v1614, %v1690
        %1693 = vset.pattern.permute.xlu0 15
        %1694 = vperm.xlu0 %1693, %v361
        %v1695 = vpop.permute.xlu0 %1694
        %1697 = vset.pattern.permute.xlu0 15
        %1698 = vperm.xlu0 %1697, %v362
        %v1699 = vpop.permute.xlu0 %1698
        %v1701 = vld [vmem:[#allocation2 + $0x1f] sm:$0x1]
        %v1702 = vlaneseq
        %v1703 = vshrl.u32 %v1702, 7
        %v1704 = vsub.s32 0, %v1703
        %v1705 = vrot.slane %v1701, %v1704
        %v1706 = vsub.f32 %v1695, %v1705
        %v1707 = vsub.f32 %v1699, %v1705
        %v1708 = vld [vmem:[#allocation2 + $0xf] sm:$0x1]
        %v1709 = vlaneseq
        %v1710 = vshrl.u32 %v1709, 7
        %v1711 = vsub.s32 0, %v1710
        %v1712 = vrot.slane %v1708, %v1711
        %v1713 = vmul.f32 %v1706, %v1712
        %v1714 = vmul.f32 %v1707, %v1712
        %v1715 = vmul.f32 %v1713, %v1713
        %v1716 = vmul.f32 %v1714, %v1714
        %v1717 = vsub.f32 %v1715, 1.0
        %v1718 = vsub.f32 %v1716, 1.0
        %v1719 = vmul.f32 %v1715, -0.5
        %v1720 = vmul.f32 %v1716, -0.5
        %v1721 = vmul.f32 %v1719, 1.442695
        %v1722 = vpow.pop %v1721
        %v1723 = vmul.f32 %v1720, 1.442695
        %v1724 = vpow.pop %v1723
        %v1725 = vmul.f32 %v1717, %v1722
        %v1726 = vmul.f32 %v1718, %v1724
        %v1727 = vld [vmem:[#allocation2 + $0x2f] sm:$0x1]
        %v1728 = vlaneseq
        %v1729 = vshrl.u32 %v1728, 7
        %v1730 = vsub.s32 0, %v1729
        %v1731 = vrot.slane %v1727, %v1730
        %v1732 = vmul.f32 %v1725, %v1731
        %v1733 = vmul.f32 %v1726, %v1731
        %v1734 = vadd.f32 %v1656, %v1732
        %v1735 = vadd.f32 %v1657, %v1733
        %v1736 = vld [vmem:[#allocation5 + $0x1f] sm:$0x1]
        %v1737 = vlaneseq
        %v1738 = vshrl.u32 %v1737, 7
        %v1739 = vsub.s32 0, %v1738
        %v1740 = vrot.slane %v1736, %v1739
        %v1741 = vsub.f32 %v1695, %v1740
        %v1742 = vsub.f32 %v1699, %v1740
        %v1743 = vld [vmem:[#allocation5 + $0xf] sm:$0x1]
        %v1744 = vlaneseq
        %v1745 = vshrl.u32 %v1744, 7
        %v1746 = vsub.s32 0, %v1745
        %v1747 = vrot.slane %v1743, %v1746
        %v1748 = vmul.f32 %v1741, %v1747
        %v1749 = vmul.f32 %v1742, %v1747
        %v1750 = vmul.f32 %v1748, %v1748
        %v1751 = vmul.f32 %v1749, %v1749
        %v1752 = vsub.f32 %v1750, 1.0
        %v1753 = vsub.f32 %v1751, 1.0
        %v1754 = vmul.f32 %v1750, -0.5
        %v1755 = vmul.f32 %v1751, -0.5
        %v1756 = vmul.f32 %v1754, 1.442695
        %v1757 = vpow.pop %v1756
        %v1758 = vmul.f32 %v1755, 1.442695
        %v1759 = vpow.pop %v1758
        %v1760 = vmul.f32 %v1752, %v1757
        %v1761 = vmul.f32 %v1753, %v1759
        %v1762 = vld [vmem:[#allocation5 + $0x2f] sm:$0x1]
        %v1763 = vlaneseq
        %v1764 = vshrl.u32 %v1763, 7
        %v1765 = vsub.s32 0, %v1764
        %v1766 = vrot.slane %v1762, %v1765
        %v1767 = vmul.f32 %v1760, %v1766
        %v1768 = vmul.f32 %v1761, %v1766
        %v1769 = vadd.f32 %v1691, %v1767
        %v1770 = vadd.f32 %v1692, %v1768
        %v1771 = vmul.f32 %v307, %v335
        %v1772 = vmul.f32 %v308, %v336
        %1775 = vrot.lane.b32.xlu0 %v1771, 127
        %v1776 = vpop.permute.xlu0 %1775
        %1777 = vrot.lane.b32.xlu0 %v1772, 127
        %v1778 = vpop.permute.xlu0 %1777
        %v1781 = vmul.f32 %v307, %v1776
        %v1782 = vmul.f32 %v308, %v1778
        %v1783 = vsub.f32 %v317, %v1781
        %v1784 = vsub.f32 %v318, %v1782
        %1786 = vset.pattern.permute.xlu0 12
        %1787 = vperm.xlu0 %1786, %v509
        %v1788 = vpop.permute.xlu0 %1787
        %1791 = vset.pattern.permute.xlu0 12
        %1792 = vperm.xlu0 %1791, %v510
        %v1793 = vpop.permute.xlu0 %1792
        %v1795 = vmul.f32 %v1788, %v469
        %v1796 = vmul.f32 %v1793, %v475
        %1797 = vset.pattern.permute.xlu0 13
        %1798 = vperm.xlu0 %1797, %v509
        %v1799 = vpop.permute.xlu0 %1798
        %1801 = vset.pattern.permute.xlu0 13
        %1802 = vperm.xlu0 %1801, %v510
        %v1803 = vpop.permute.xlu0 %1802
        %v1805 = vmul.f32 %v1799, %v471
        %v1806 = vmul.f32 %v1803, %v477
        %v1807 = vadd.f32 %v1795, %v1805
        %v1808 = vadd.f32 %v1796, %v1806
        %1809 = vset.pattern.permute.xlu0 14
        %1810 = vperm.xlu0 %1809, %v509
        %v1811 = vpop.permute.xlu0 %1810
        %1813 = vset.pattern.permute.xlu0 14
        %1814 = vperm.xlu0 %1813, %v510
        %v1815 = vpop.permute.xlu0 %1814
        %v1817 = vmul.f32 %v1811, %v1734
        %v1818 = vmul.f32 %v1815, %v1735
        %v1819 = vadd.f32 %v1807, %v1817
        %v1820 = vadd.f32 %v1808, %v1818
        %1821 = vset.pattern.permute.xlu0 15
        %1822 = vperm.xlu0 %1821, %v509
        %v1823 = vpop.permute.xlu0 %1822
        %1825 = vset.pattern.permute.xlu0 15
        %1826 = vperm.xlu0 %1825, %v510
        %v1827 = vpop.permute.xlu0 %1826
        %v1829 = vmul.f32 %v1823, %v1769
        %v1830 = vmul.f32 %v1827, %v1770
        %v1831 = vadd.f32 %v1819, %v1829
        %v1832 = vadd.f32 %v1820, %v1830
        %1833 = vset.pattern.permute.xlu0 2
        %1834 = vperm.xlu0 %1833, %v1771
        %v1835 = vpop.permute.xlu0 %1834
        %1837 = vset.pattern.permute.xlu0 2
        %1838 = vperm.xlu0 %1837, %v1772
        %v1839 = vpop.permute.xlu0 %1838
        %v1841 = vmul.f32 %v1831, %v1835
        %v1842 = vmul.f32 %v1832, %v1839
        %1844 = vset.pattern.permute.xlu0 1
        %1845 = vperm.xlu0 %1844, %v1783
        %v1846 = vpop.permute.xlu0 %1845
        %1849 = vset.pattern.permute.xlu0 1
        %1850 = vperm.xlu0 %1849, %v1784
        %v1851 = vpop.permute.xlu0 %1850
        %v1853 = vadd.f32 %v1841, %v1846
        %v1854 = vadd.f32 %v1842, %v1851
        %1855 = vst [vmem:[%s291] sm:$0xff] %v1853
        %1856 = vst [vmem:[%s291 + $0x8] sm:$0xff] %v1854
        %s1857 = sand.u32 %s166, 1
        %s1858 = scalar_lea.sflag [#allocation4], %s1857
        %s1859 = sand.u32 %s166, 1
        %s1860 = smul.addr %s1859, 16
        %s1861 = scalar_lea.vmem [#allocation7], %s1860
        // Predicated region
        $region53: #{tpu_custom_call.1} parent=43 // pred_check
          %p1862 = pneg %p176
        $region54: #{tpu_custom_call.1} parent=43 // pred_check_branch
          %1864 = sbr.rel (%p1862) target = $region56
        $region55: #{tpu_custom_call.1} parent=43 // pred_region
          %s1865 = smul.u32 2, %s22
          %s1867 = ssub.s32 256, 256
          %1868 = vsyncadd %s1858, %s1867
          %s1869 = smul.addr %s1865, 128
          %s1870 = scalar_lea.hbm %s6, %s1869
          %s1871 = sshll.u32 %s1861, 4
          %s1872 = int_to_ptr.vmem [resolvable:$true] %s1871
          %1877 = dma.vmem_to_hbm [thread:$0]  %s1872, 256, %s1870, %s1858, 128, 128, 8
        $region56: #{tpu_custom_call.1} parent=43 // pred_fallthru
          _
      $region44: #{tpu_custom_call.1} parent=5 // pred_fallthru
        _
      %p1878 = scmp.le.s32.totalorder 2, %s17
      // Predicated region
      $region57: #{tpu_custom_call.1} parent=5 // pred_check
        %p1879 = pneg %p1878
      $region58: #{tpu_custom_call.1} parent=5 // pred_check_branch
        %1881 = sbr.rel (%p1879) target = $region60
      $region59: #{tpu_custom_call.1} parent=5 // pred_region
        %s1882 = ssub.s32 %s17, 2
        // Predicated region
        $region61: #{tpu_custom_call.1} parent=59 // pred_check
          %p1883 = pneg %p182
        $region62: #{tpu_custom_call.1} parent=59 // pred_check_branch
          %1885 = sbr.rel (%p1883) target = $region64
        $region63: #{tpu_custom_call.1} parent=59 // pred_region
          %s1886 = sand.u32 %s167, 1
          %s1887 = scalar_lea.sflag [#allocation4], %s1886
          %s1888 = sand.u32 %s167, 1
          %s1889 = smul.addr %s1888, 16
          %s1890 = scalar_lea.vmem [#allocation7], %s1889
          %1891 = dma.done %s1887, 256
        $region64: #{tpu_custom_call.1} parent=59 // pred_fallthru
          _
      $region60: #{tpu_custom_call.1} parent=5 // pred_fallthru
        _
    $region6: #{tpu_custom_call.1} parent=1 // loop_footer
      %s21 = sadd.s32 1, %s17
    $region7: #{tpu_custom_call.1} parent=1 // loop_footer_branch
      %16 = sbr.rel target = $region3
    $region8: #{tpu_custom_call.1} parent=1 // loop_exit
      _
    %1892 = vsyncpa [#allocation3], 1
    %s1893 = scalar_lea.sflag [#allocation3], 1
    %1894 = vsyncpa %s1893, 1
    %1895 = vsyncpa [#allocation6], 1
    %1896 = vsyncpa [#allocation4], 1
    %s1897 = scalar_lea.sflag [#allocation4], 1
    %1898 = vsyncpa %s1897, 1

</llo_original>
